<compile_context>
chip_gen: v7x
topology: tpu7x:2x2x1
jax: 0.10.0
libtpu: 0.0.40
codegen_flags: <defaults>
</compile_context>

<pallas_src>
import functools

import jax
import jax.numpy as jnp
from jax.experimental import pallas as pl
from jax.experimental.pallas import tpu as pltpu


def mem_block_kernel(xp_ref, masks_ref, w1_ref, b1_ref, w2_ref, b2_ref,
                     w3s_ref, b3_ref, out_ref, *, W, matmul_dtype):
    """One grid step = B_blk images folded into the lane axis.

    xp_ref:    (1, 2*Cin, L)   concat(x, past), L = B_blk*H*W (lane-dense)
    masks_ref: (9, L)          0/1 boundary-validity mask per conv tap
    w1/w2:     (Cout, 9*C)     repacked conv weights (tap-major, ci-minor)
    w3s:       (Cout, 9*Cout + 2*Cin)   conv3 weights with 1x1 skip fused
    b*:        (Cout, 1)
    out_ref:   (1, Cout, L)
    """
    xp = xp_ref[0]                                   # (2*Cin, L) f32
    Cin2 = xp.shape[0]
    Cout = out_ref.shape[1]
    L = xp.shape[1]

    # Static tap schedule: (roll shift, needs boundary mask, tap index).
    taps = []
    for kh in range(3):
        for kw in range(3):
            dh, dw = kh - 1, kw - 1
            off = dh * W + dw                        # source pixel = p + off
            taps.append(((-off) % L, (dh, dw) != (0, 0), kh * 3 + kw))

    # Hoisted boundary-mask broadcasts: built once, reused by all three convs.
    CH = max(Cin2, Cout)
    bmask = {t: jnp.broadcast_to(masks_ref[t:t + 1, :], (CH, L))
             for _, needs, t in taps if needs}

    def conv3x3(a, w_ref, b_ref, extra=None):
        # a: (C, L) f32.  Build the (9*C [+ extra rows], L) im2col patch slab
        # via XLU rolls + boundary masks, contract in ONE MXU matmul.
        C = a.shape[0]
        pieces = []
        for shift, needs, t in taps:
            piece = a if shift == 0 else pltpu.roll(a, shift=shift, axis=1)
            if needs:
                piece = piece * bmask[t][:C, :]      # zero wrapped-in taps (f32 VPU)
            pieces.append(piece.astype(matmul_dtype))
        if extra is not None:                        # fused 1x1-skip operand
            pieces.append(extra.astype(matmul_dtype))
        patches = jnp.concatenate(pieces, axis=0)    # sublane stack, relayout-free
        return jnp.dot(w_ref[...], patches,
                       preferred_element_type=jnp.float32) + b_ref[...]

    h = jnp.maximum(conv3x3(xp, w1_ref, b1_ref), 0.0)
    h = jnp.maximum(conv3x3(h, w2_ref, b2_ref), 0.0)
    # Third conv with the 1x1 skip fused into the same contraction:
    #   [w3 | ws_zero_padded] @ [patches(h) ; xp] + b3
    h = conv3x3(h, w3s_ref, b3_ref, extra=xp)
    out_ref[0] = jnp.maximum(h, 0.0).astype(out_ref.dtype)


def _build_tap_masks(H, W):
    """(9, H*W) float32 validity masks for the 9 conv taps (SAME padding)."""
    hh, ww = jnp.meshgrid(jnp.arange(H), jnp.arange(W), indexing="ij")
    hh = hh.reshape(-1)
    ww = ww.reshape(-1)
    masks = []
    for kh in range(3):
        for kw in range(3):
            dh, dw = kh - 1, kw - 1
            valid = ((hh + dh >= 0) & (hh + dh <= H - 1) &
                     (ww + dw >= 0) & (ww + dw <= W - 1))
            masks.append(valid.astype(jnp.float32))
    return jnp.stack(masks, axis=0)


def _choose_b_blk(N, HW, lane_target=2048):
    """Largest divisor of N keeping lane width <= lane_target while leaving
    >= 2 grid steps when N >= 2 (so v7x shards across both TensorCores)."""
    best = 1
    for d in range(1, N + 1):
        if N % d:
            continue
        if d * HW > lane_target:
            continue
        if N >= 2 and N // d < 2:
            continue
        best = d
    return best


def mem_block(x, past, params, *, matmul_dtype=jnp.float32):
    """x, past: (N, Cin, H, W) float32 (NCHW, like PyTorch).
    Returns (N, Cout, H, W) float32."""
    N, Cin, H, W = x.shape
    w1, b1, w2, b2, w3, b3, ws = params      # PyTorch layouts: OIHW / (Co,) / (Co,Ci)
    Cout = w1.shape[0]
    HW = H * W
    B_blk = _choose_b_blk(N, HW)
    G = N // B_blk
    L = B_blk * HW

    # ---- wrapper-side repacking (cheap one-off XLA ops) ----
    # Fold B_blk images into the lane axis: (G, 2*Cin, B_blk*HW).
    xp = jnp.concatenate([x, past], axis=1).reshape(G, B_blk, 2 * Cin, HW)
    xp = xp.transpose(0, 2, 1, 3).reshape(G, 2 * Cin, L).astype(jnp.float32)
    tap_masks = jnp.tile(_build_tap_masks(H, W), (1, B_blk))         # (9, L)

    def to_mat(w):   # OIHW (Co, Ci, 3, 3) -> (Co, 9*Ci), tap-major / ci-minor
        return jnp.transpose(w, (0, 2, 3, 1)).reshape(w.shape[0], -1)

    w1m, w2m = to_mat(w1), to_mat(w2)
    # Fuse the 1x1 skip into conv3: zero-pad ws over the `past` channels and
    # append it to conv3's contraction weights.
    ws_pad = jnp.concatenate(
        [ws.astype(jnp.float32), jnp.zeros((Cout, Cin), jnp.float32)], axis=1)
    w3s = jnp.concatenate([to_mat(w3), ws_pad], axis=1)     # (Co, 9*Co + 2*Cin)
    w1m, w2m, w3s = (w.astype(matmul_dtype) for w in (w1m, w2m, w3s))
    b1c, b2c, b3c = (b.reshape(-1, 1).astype(jnp.float32) for b in (b1, b2, b3))

    def full_spec(arr):
        nd = arr.ndim
        return pl.BlockSpec(arr.shape, lambda g, _nd=nd: (0,) * _nd)

    grid_spec = pltpu.PrefetchScalarGridSpec(
        num_scalar_prefetch=0,
        grid=(G,),
        in_specs=[
            pl.BlockSpec((1, 2 * Cin, L), lambda g: (g, 0, 0)),
            full_spec(tap_masks),
            full_spec(w1m), full_spec(b1c),
            full_spec(w2m), full_spec(b2c),
            full_spec(w3s), full_spec(b3c),
        ],
        out_specs=pl.BlockSpec((1, Cout, L), lambda g: (g, 0, 0)),
    )

    out = pl.pallas_call(
        functools.partial(mem_block_kernel, W=W, matmul_dtype=matmul_dtype),
        out_shape=jax.ShapeDtypeStruct((G, Cout, L), jnp.float32),
        grid_spec=grid_spec,
        compiler_params=pltpu.CompilerParams(
            dimension_semantics=("parallel",)),
    )(xp, tap_masks, w1m, b1c, w2m, b2c, w3s, b3c)

    # Un-fold the batch from the lane axis.
    out = out.reshape(G, Cout, B_blk, HW).transpose(0, 2, 1, 3)
    return out.reshape(N, Cout, H, W)


def init_params(key, n_in, n_out):
    """Deterministic synthetic parameters in PyTorch layouts (not a checkpoint)."""
    ks = jax.random.split(key, 7)
    s = 0.1
    w1 = s * jax.random.normal(ks[0], (n_out, 2 * n_in, 3, 3), jnp.float32)
    b1 = s * jax.random.normal(ks[1], (n_out,), jnp.float32)
    w2 = s * jax.random.normal(ks[2], (n_out, n_out, 3, 3), jnp.float32)
    b2 = s * jax.random.normal(ks[3], (n_out,), jnp.float32)
    w3 = s * jax.random.normal(ks[4], (n_out, n_out, 3, 3), jnp.float32)
    b3 = s * jax.random.normal(ks[5], (n_out,), jnp.float32)
    if n_in != n_out:
        ws = s * jax.random.normal(ks[6], (n_out, n_in), jnp.float32)
    else:
        ws = jnp.eye(n_in, dtype=jnp.float32)    # nn.Identity() skip
    return (w1, b1, w2, b2, w3, b3, ws)


def ref_mem_block(x, past, params):
    """Pure-JAX reference (NCHW / OIHW), mirrors the PyTorch module."""
    w1, b1, w2, b2, w3, b3, ws = params
    dn = ('NCHW', 'OIHW', 'NCHW')

    def c3(inp, w, b):
        out = jax.lax.conv_general_dilated(
            inp, w, (1, 1), 'SAME', dimension_numbers=dn,
            precision=jax.lax.Precision.HIGHEST)
        return out + b.reshape(1, -1, 1, 1)

    h = jax.nn.relu(c3(jnp.concatenate([x, past], axis=1), w1, b1))
    h = jax.nn.relu(c3(h, w2, b2))
    h = c3(h, w3, b3)
    skip = jnp.einsum('nchw,oc->nohw', x, ws,
                      precision=jax.lax.Precision.HIGHEST)
    return jax.nn.relu(h + skip)


if __name__ == "__main__":
    # B_blk=4 images folded per grid step -> lane width 1024; grid=(2,) stays
    # "parallel" so both v7x TensorCores are used.
    N, Cin, Cout, H, W = 8, 4, 8, 16, 16

    key = jax.random.PRNGKey(0)
    kx, kp, kw = jax.random.split(key, 3)
    x = jax.random.normal(kx, (N, Cin, H, W), jnp.float32)
    past = jax.random.normal(kp, (N, Cin, H, W), jnp.float32)
    params = init_params(kw, Cin, Cout)

    ref = jax.block_until_ready(ref_mem_block(x, past, params))

    # f32 matmul path (tight check).
    out = jax.block_until_ready(mem_block(x, past, params))
    assert out.shape == (N, Cout, H, W)
    err_f32 = float(jnp.max(jnp.abs(out - ref)))
    assert err_f32 < 1e-3, f"f32 mismatch vs reference: {err_f32}"

    # bf16 matmul inputs / f32 accumulation (looser tolerance per review caveat).
    out_bf16 = jax.block_until_ready(
        mem_block(x, past, params, matmul_dtype=jnp.bfloat16))
    err_bf16 = float(jnp.max(jnp.abs(out_bf16 - ref)))
    assert err_bf16 < 1e-1, f"bf16 mismatch vs reference: {err_bf16}"

    print("KERNEL_OK")
</pallas_src>

<mosaic_0001>
module attributes {stable_mosaic.version = 11 : i64} {
  func.func @mem_block_kernel(%arg0: i32, %arg1: memref<1x8x1024xf32, #tpu.memory_space<vmem>>, %arg2: memref<9x1024xf32, #tpu.memory_space<vmem>>, %arg3: memref<8x72xf32, #tpu.memory_space<vmem>>, %arg4: memref<8x1xf32, #tpu.memory_space<vmem>>, %arg5: memref<8x72xf32, #tpu.memory_space<vmem>>, %arg6: memref<8x1xf32, #tpu.memory_space<vmem>>, %arg7: memref<8x80xf32, #tpu.memory_space<vmem>>, %arg8: memref<8x1xf32, #tpu.memory_space<vmem>>, %arg9: memref<1x8x1024xf32, #tpu.memory_space<vmem>>) attributes {dimension_semantics = [#tpu.dimension_semantics<parallel>], iteration_bounds = array<i64: 2>, scalar_prefetch = 0 : i64, scratch_operands = 0 : i64, tpu.core_type = #tpu.core_type<tc>, window_params = [{transform_indices = @transform_0, window_bounds = array<i64: 1, 8, 1024>}, {pipeline_mode = #tpu.pipeline_mode<synchronous>, transform_indices = @transform_1, window_bounds = array<i64: 9, 1024>}, {pipeline_mode = #tpu.pipeline_mode<synchronous>, transform_indices = @transform_2, window_bounds = array<i64: 8, 72>}, {pipeline_mode = #tpu.pipeline_mode<synchronous>, transform_indices = @transform_3, window_bounds = array<i64: 8, 1>}, {pipeline_mode = #tpu.pipeline_mode<synchronous>, transform_indices = @transform_4, window_bounds = array<i64: 8, 72>}, {pipeline_mode = #tpu.pipeline_mode<synchronous>, transform_indices = @transform_5, window_bounds = array<i64: 8, 1>}, {pipeline_mode = #tpu.pipeline_mode<synchronous>, transform_indices = @transform_6, window_bounds = array<i64: 8, 80>}, {pipeline_mode = #tpu.pipeline_mode<synchronous>, transform_indices = @transform_7, window_bounds = array<i64: 8, 1>}, {transform_indices = @transform_8, window_bounds = array<i64: 1, 8, 1024>}]} {
    %c0 = arith.constant 0 : index
    %c0_0 = arith.constant 0 : index
    %c0_1 = arith.constant 0 : index
    %0 = vector.load %arg1[%c0, %c0_0, %c0_1] : memref<1x8x1024xf32, #tpu.memory_space<vmem>>, vector<1x8x1024xf32>
    %1 = vector.shape_cast %0 : vector<1x8x1024xf32> to vector<8x1024xf32>
    %c0_2 = arith.constant 0 : index
    %c0_3 = arith.constant 0 : index
    %2 = vector.load %arg2[%c0_2, %c0_3] : memref<9x1024xf32, #tpu.memory_space<vmem>>, vector<1x1024xf32>
    %3 = vector.shape_cast %2 : vector<1x1024xf32> to vector<1x1024xf32>
    %4 = vector.broadcast %3 : vector<1x1024xf32> to vector<8x1024xf32>
    %c1 = arith.constant 1 : index
    %c0_4 = arith.constant 0 : index
    %5 = vector.load %arg2[%c1, %c0_4] : memref<9x1024xf32, #tpu.memory_space<vmem>>, vector<1x1024xf32>
    %6 = vector.shape_cast %5 : vector<1x1024xf32> to vector<1x1024xf32>
    %7 = vector.broadcast %6 : vector<1x1024xf32> to vector<8x1024xf32>
    %c2 = arith.constant 2 : index
    %c0_5 = arith.constant 0 : index
    %8 = vector.load %arg2[%c2, %c0_5] : memref<9x1024xf32, #tpu.memory_space<vmem>>, vector<1x1024xf32>
    %9 = vector.shape_cast %8 : vector<1x1024xf32> to vector<1x1024xf32>
    %10 = vector.broadcast %9 : vector<1x1024xf32> to vector<8x1024xf32>
    %c3 = arith.constant 3 : index
    %c0_6 = arith.constant 0 : index
    %11 = vector.load %arg2[%c3, %c0_6] : memref<9x1024xf32, #tpu.memory_space<vmem>>, vector<1x1024xf32>
    %12 = vector.shape_cast %11 : vector<1x1024xf32> to vector<1x1024xf32>
    %13 = vector.broadcast %12 : vector<1x1024xf32> to vector<8x1024xf32>
    %c5 = arith.constant 5 : index
    %c0_7 = arith.constant 0 : index
    %14 = vector.load %arg2[%c5, %c0_7] : memref<9x1024xf32, #tpu.memory_space<vmem>>, vector<1x1024xf32>
    %15 = vector.shape_cast %14 : vector<1x1024xf32> to vector<1x1024xf32>
    %16 = vector.broadcast %15 : vector<1x1024xf32> to vector<8x1024xf32>
    %c6 = arith.constant 6 : index
    %c0_8 = arith.constant 0 : index
    %17 = vector.load %arg2[%c6, %c0_8] : memref<9x1024xf32, #tpu.memory_space<vmem>>, vector<1x1024xf32>
    %18 = vector.shape_cast %17 : vector<1x1024xf32> to vector<1x1024xf32>
    %19 = vector.broadcast %18 : vector<1x1024xf32> to vector<8x1024xf32>
    %c7 = arith.constant 7 : index
    %c0_9 = arith.constant 0 : index
    %20 = vector.load %arg2[%c7, %c0_9] : memref<9x1024xf32, #tpu.memory_space<vmem>>, vector<1x1024xf32>
    %21 = vector.shape_cast %20 : vector<1x1024xf32> to vector<1x1024xf32>
    %22 = vector.broadcast %21 : vector<1x1024xf32> to vector<8x1024xf32>
    %c8 = arith.constant 8 : index
    %c0_10 = arith.constant 0 : index
    %23 = vector.load %arg2[%c8, %c0_10] : memref<9x1024xf32, #tpu.memory_space<vmem>>, vector<1x1024xf32>
    %24 = vector.shape_cast %23 : vector<1x1024xf32> to vector<1x1024xf32>
    %25 = vector.broadcast %24 : vector<1x1024xf32> to vector<8x1024xf32>
    %c17_i32 = arith.constant 17 : i32
    %26 = tpu.dynamic_rotate %1 by %c17_i32 dim 1 : vector<8x1024xf32>, i32 -> vector<8x1024xf32>
    %27 = arith.mulf %26, %4 : vector<8x1024xf32>
    %c16_i32 = arith.constant 16 : i32
    %28 = tpu.dynamic_rotate %1 by %c16_i32 dim 1 : vector<8x1024xf32>, i32 -> vector<8x1024xf32>
    %29 = arith.mulf %28, %7 : vector<8x1024xf32>
    %c15_i32 = arith.constant 15 : i32
    %30 = tpu.dynamic_rotate %1 by %c15_i32 dim 1 : vector<8x1024xf32>, i32 -> vector<8x1024xf32>
    %31 = arith.mulf %30, %10 : vector<8x1024xf32>
    %c1_i32 = arith.constant 1 : i32
    %32 = tpu.dynamic_rotate %1 by %c1_i32 dim 1 : vector<8x1024xf32>, i32 -> vector<8x1024xf32>
    %33 = arith.mulf %32, %13 : vector<8x1024xf32>
    %c1023_i32 = arith.constant 1023 : i32
    %34 = tpu.dynamic_rotate %1 by %c1023_i32 dim 1 : vector<8x1024xf32>, i32 -> vector<8x1024xf32>
    %35 = arith.mulf %34, %16 : vector<8x1024xf32>
    %c1009_i32 = arith.constant 1009 : i32
    %36 = tpu.dynamic_rotate %1 by %c1009_i32 dim 1 : vector<8x1024xf32>, i32 -> vector<8x1024xf32>
    %37 = arith.mulf %36, %19 : vector<8x1024xf32>
    %c1008_i32 = arith.constant 1008 : i32
    %38 = tpu.dynamic_rotate %1 by %c1008_i32 dim 1 : vector<8x1024xf32>, i32 -> vector<8x1024xf32>
    %39 = arith.mulf %38, %22 : vector<8x1024xf32>
    %c1007_i32 = arith.constant 1007 : i32
    %40 = tpu.dynamic_rotate %1 by %c1007_i32 dim 1 : vector<8x1024xf32>, i32 -> vector<8x1024xf32>
    %41 = arith.mulf %40, %25 : vector<8x1024xf32>
    %42 = tpu.concatenate %27, %29, %31, %33, %1, %35, %37, %39, %41 in 0 : vector<8x1024xf32>, vector<8x1024xf32>, vector<8x1024xf32>, vector<8x1024xf32>, vector<8x1024xf32>, vector<8x1024xf32>, vector<8x1024xf32>, vector<8x1024xf32>, vector<8x1024xf32> -> vector<72x1024xf32>
    %c0_11 = arith.constant 0 : index
    %c0_12 = arith.constant 0 : index
    %43 = vector.load %arg3[%c0_11, %c0_12] : memref<8x72xf32, #tpu.memory_space<vmem>>, vector<8x72xf32>
    %cst = arith.constant dense<0.000000e+00> : vector<8x1024xf32>
    %44 = tpu.matmul %43, %42, %cst {dimension_numbers = #tpu.dot_dimension_numbers<[1], [0], [0], [1], [0, 0, 1, 1], [], []>} : vector<8x72xf32>, vector<72x1024xf32>, vector<8x1024xf32> -> vector<8x1024xf32>
    %c0_13 = arith.constant 0 : index
    %c0_14 = arith.constant 0 : index
    %45 = vector.load %arg4[%c0_13, %c0_14] : memref<8x1xf32, #tpu.memory_space<vmem>>, vector<8x1xf32>
    %46 = vector.broadcast %45 : vector<8x1xf32> to vector<8x1024xf32>
    %47 = arith.addf %44, %46 : vector<8x1024xf32>
    %cst_15 = arith.constant 0.000000e+00 : f32
    %48 = vector.broadcast %cst_15 : f32 to vector<8x1024xf32>
    %49 = arith.maximumf %47, %48 : vector<8x1024xf32>
    %c17_i32_16 = arith.constant 17 : i32
    %50 = tpu.dynamic_rotate %49 by %c17_i32_16 dim 1 : vector<8x1024xf32>, i32 -> vector<8x1024xf32>
    %51 = arith.mulf %50, %4 : vector<8x1024xf32>
    %c16_i32_17 = arith.constant 16 : i32
    %52 = tpu.dynamic_rotate %49 by %c16_i32_17 dim 1 : vector<8x1024xf32>, i32 -> vector<8x1024xf32>
    %53 = arith.mulf %52, %7 : vector<8x1024xf32>
    %c15_i32_18 = arith.constant 15 : i32
    %54 = tpu.dynamic_rotate %49 by %c15_i32_18 dim 1 : vector<8x1024xf32>, i32 -> vector<8x1024xf32>
    %55 = arith.mulf %54, %10 : vector<8x1024xf32>
    %c1_i32_19 = arith.constant 1 : i32
    %56 = tpu.dynamic_rotate %49 by %c1_i32_19 dim 1 : vector<8x1024xf32>, i32 -> vector<8x1024xf32>
    %57 = arith.mulf %56, %13 : vector<8x1024xf32>
    %c1023_i32_20 = arith.constant 1023 : i32
    %58 = tpu.dynamic_rotate %49 by %c1023_i32_20 dim 1 : vector<8x1024xf32>, i32 -> vector<8x1024xf32>
    %59 = arith.mulf %58, %16 : vector<8x1024xf32>
    %c1009_i32_21 = arith.constant 1009 : i32
    %60 = tpu.dynamic_rotate %49 by %c1009_i32_21 dim 1 : vector<8x1024xf32>, i32 -> vector<8x1024xf32>
    %61 = arith.mulf %60, %19 : vector<8x1024xf32>
    %c1008_i32_22 = arith.constant 1008 : i32
    %62 = tpu.dynamic_rotate %49 by %c1008_i32_22 dim 1 : vector<8x1024xf32>, i32 -> vector<8x1024xf32>
    %63 = arith.mulf %62, %22 : vector<8x1024xf32>
    %c1007_i32_23 = arith.constant 1007 : i32
    %64 = tpu.dynamic_rotate %49 by %c1007_i32_23 dim 1 : vector<8x1024xf32>, i32 -> vector<8x1024xf32>
    %65 = arith.mulf %64, %25 : vector<8x1024xf32>
    %66 = tpu.concatenate %51, %53, %55, %57, %49, %59, %61, %63, %65 in 0 : vector<8x1024xf32>, vector<8x1024xf32>, vector<8x1024xf32>, vector<8x1024xf32>, vector<8x1024xf32>, vector<8x1024xf32>, vector<8x1024xf32>, vector<8x1024xf32>, vector<8x1024xf32> -> vector<72x1024xf32>
    %c0_24 = arith.constant 0 : index
    %c0_25 = arith.constant 0 : index
    %67 = vector.load %arg5[%c0_24, %c0_25] : memref<8x72xf32, #tpu.memory_space<vmem>>, vector<8x72xf32>
    %cst_26 = arith.constant dense<0.000000e+00> : vector<8x1024xf32>
    %68 = tpu.matmul %67, %66, %cst_26 {dimension_numbers = #tpu.dot_dimension_numbers<[1], [0], [0], [1], [0, 0, 1, 1], [], []>} : vector<8x72xf32>, vector<72x1024xf32>, vector<8x1024xf32> -> vector<8x1024xf32>
    %c0_27 = arith.constant 0 : index
    %c0_28 = arith.constant 0 : index
    %69 = vector.load %arg6[%c0_27, %c0_28] : memref<8x1xf32, #tpu.memory_space<vmem>>, vector<8x1xf32>
    %70 = vector.broadcast %69 : vector<8x1xf32> to vector<8x1024xf32>
    %71 = arith.addf %68, %70 : vector<8x1024xf32>
    %cst_29 = arith.constant 0.000000e+00 : f32
    %72 = vector.broadcast %cst_29 : f32 to vector<8x1024xf32>
    %73 = arith.maximumf %71, %72 : vector<8x1024xf32>
    %c17_i32_30 = arith.constant 17 : i32
    %74 = tpu.dynamic_rotate %73 by %c17_i32_30 dim 1 : vector<8x1024xf32>, i32 -> vector<8x1024xf32>
    %75 = arith.mulf %74, %4 : vector<8x1024xf32>
    %c16_i32_31 = arith.constant 16 : i32
    %76 = tpu.dynamic_rotate %73 by %c16_i32_31 dim 1 : vector<8x1024xf32>, i32 -> vector<8x1024xf32>
    %77 = arith.mulf %76, %7 : vector<8x1024xf32>
    %c15_i32_32 = arith.constant 15 : i32
    %78 = tpu.dynamic_rotate %73 by %c15_i32_32 dim 1 : vector<8x1024xf32>, i32 -> vector<8x1024xf32>
    %79 = arith.mulf %78, %10 : vector<8x1024xf32>
    %c1_i32_33 = arith.constant 1 : i32
    %80 = tpu.dynamic_rotate %73 by %c1_i32_33 dim 1 : vector<8x1024xf32>, i32 -> vector<8x1024xf32>
    %81 = arith.mulf %80, %13 : vector<8x1024xf32>
    %c1023_i32_34 = arith.constant 1023 : i32
    %82 = tpu.dynamic_rotate %73 by %c1023_i32_34 dim 1 : vector<8x1024xf32>, i32 -> vector<8x1024xf32>
    %83 = arith.mulf %82, %16 : vector<8x1024xf32>
    %c1009_i32_35 = arith.constant 1009 : i32
    %84 = tpu.dynamic_rotate %73 by %c1009_i32_35 dim 1 : vector<8x1024xf32>, i32 -> vector<8x1024xf32>
    %85 = arith.mulf %84, %19 : vector<8x1024xf32>
    %c1008_i32_36 = arith.constant 1008 : i32
    %86 = tpu.dynamic_rotate %73 by %c1008_i32_36 dim 1 : vector<8x1024xf32>, i32 -> vector<8x1024xf32>
    %87 = arith.mulf %86, %22 : vector<8x1024xf32>
    %c1007_i32_37 = arith.constant 1007 : i32
    %88 = tpu.dynamic_rotate %73 by %c1007_i32_37 dim 1 : vector<8x1024xf32>, i32 -> vector<8x1024xf32>
    %89 = arith.mulf %88, %25 : vector<8x1024xf32>
    %90 = tpu.concatenate %75, %77, %79, %81, %73, %83, %85, %87, %89, %1 in 0 : vector<8x1024xf32>, vector<8x1024xf32>, vector<8x1024xf32>, vector<8x1024xf32>, vector<8x1024xf32>, vector<8x1024xf32>, vector<8x1024xf32>, vector<8x1024xf32>, vector<8x1024xf32>, vector<8x1024xf32> -> vector<80x1024xf32>
    %c0_38 = arith.constant 0 : index
    %c0_39 = arith.constant 0 : index
    %91 = vector.load %arg7[%c0_38, %c0_39] : memref<8x80xf32, #tpu.memory_space<vmem>>, vector<8x80xf32>
    %cst_40 = arith.constant dense<0.000000e+00> : vector<8x1024xf32>
    %92 = tpu.matmul %91, %90, %cst_40 {dimension_numbers = #tpu.dot_dimension_numbers<[1], [0], [0], [1], [0, 0, 1, 1], [], []>} : vector<8x80xf32>, vector<80x1024xf32>, vector<8x1024xf32> -> vector<8x1024xf32>
    %c0_41 = arith.constant 0 : index
    %c0_42 = arith.constant 0 : index
    %93 = vector.load %arg8[%c0_41, %c0_42] : memref<8x1xf32, #tpu.memory_space<vmem>>, vector<8x1xf32>
    %94 = vector.broadcast %93 : vector<8x1xf32> to vector<8x1024xf32>
    %95 = arith.addf %92, %94 : vector<8x1024xf32>
    %cst_43 = arith.constant 0.000000e+00 : f32
    %96 = vector.broadcast %cst_43 : f32 to vector<8x1024xf32>
    %97 = arith.maximumf %95, %96 : vector<8x1024xf32>
    %c0_44 = arith.constant 0 : index
    %c0_45 = arith.constant 0 : index
    %c0_46 = arith.constant 0 : index
    %98 = vector.load %arg9[%c0_44, %c0_45, %c0_46] : memref<1x8x1024xf32, #tpu.memory_space<vmem>>, vector<1x8x1024xf32>
    %99 = vector.shape_cast %98 : vector<1x8x1024xf32> to vector<8x1024xf32>
    %100 = vector.shape_cast %97 : vector<8x1024xf32> to vector<1x8x1024xf32>
    tpu.vector_store %arg9[%c0_44, %c0_45, %c0_46], %100 {strides = array<i32>} : memref<1x8x1024xf32, #tpu.memory_space<vmem>>, vector<1x8x1024xf32>,
    return
  }
  func.func @transform_0(%arg0: i32) -> (i32, i32, i32) {
    %c0_i32 = arith.constant 0 : i32
    %c0_i32_0 = arith.constant 0 : i32
    %c0_i32_1 = arith.constant 0 : i32
    return %arg0, %c0_i32, %c0_i32_0 : i32, i32, i32
  }
  func.func @transform_1(%arg0: i32) -> (i32, i32) {
    %c0_i32 = arith.constant 0 : i32
    %c0_i32_0 = arith.constant 0 : i32
    %c0_i32_1 = arith.constant 0 : i32
    return %c0_i32, %c0_i32_0 : i32, i32
  }
  func.func @transform_2(%arg0: i32) -> (i32, i32) {
    %c0_i32 = arith.constant 0 : i32
    %c0_i32_0 = arith.constant 0 : i32
    %c0_i32_1 = arith.constant 0 : i32
    return %c0_i32, %c0_i32_0 : i32, i32
  }
  func.func @transform_3(%arg0: i32) -> (i32, i32) {
    %c0_i32 = arith.constant 0 : i32
    %c0_i32_0 = arith.constant 0 : i32
    %c0_i32_1 = arith.constant 0 : i32
    return %c0_i32, %c0_i32_0 : i32, i32
  }
  func.func @transform_4(%arg0: i32) -> (i32, i32) {
    %c0_i32 = arith.constant 0 : i32
    %c0_i32_0 = arith.constant 0 : i32
    %c0_i32_1 = arith.constant 0 : i32
    return %c0_i32, %c0_i32_0 : i32, i32
  }
  func.func @transform_5(%arg0: i32) -> (i32, i32) {
    %c0_i32 = arith.constant 0 : i32
    %c0_i32_0 = arith.constant 0 : i32
    %c0_i32_1 = arith.constant 0 : i32
    return %c0_i32, %c0_i32_0 : i32, i32
  }
  func.func @transform_6(%arg0: i32) -> (i32, i32) {
    %c0_i32 = arith.constant 0 : i32
    %c0_i32_0 = arith.constant 0 : i32
    %c0_i32_1 = arith.constant 0 : i32
    return %c0_i32, %c0_i32_0 : i32, i32
  }
  func.func @transform_7(%arg0: i32) -> (i32, i32) {
    %c0_i32 = arith.constant 0 : i32
    %c0_i32_0 = arith.constant 0 : i32
    %c0_i32_1 = arith.constant 0 : i32
    return %c0_i32, %c0_i32_0 : i32, i32
  }
  func.func @transform_8(%arg0: i32) -> (i32, i32, i32) {
    %c0_i32 = arith.constant 0 : i32
    %c0_i32_0 = arith.constant 0 : i32
    %c0_i32_1 = arith.constant 0 : i32
    return %arg0, %c0_i32, %c0_i32_0 : i32, i32, i32
  }
}

</mosaic_0001>

<llo_original>
// kernel: tpu_custom_call.1
$region0: #{tpu_custom_call.1}
  #allocation0 [shape = 'u32[]', space=smem, size = 0x4, offset = 0x4, fixed_abs, tag = 'smem constant byte address 0x4 - core index']
  #allocation1 [shape = 'u32[144,128]{1,0:T(1,128)}', space=vmem, size = 0x12000, scoped, tag = 'internal scratch']
  %s0 = inlined_call_operand.hbm [shape: f32[2,8,1024], index: 0, kind: input, shape index: {}]
  %s1 = inlined_call_operand.hbm [shape: f32[9,1024], index: 1, kind: input, shape index: {}]
  %s2 = inlined_call_operand.vmem [shape: f32[8,72], index: 2, kind: input, shape index: {}]
  %s3 = inlined_call_operand.vmem [shape: f32[8,1], index: 3, kind: input, shape index: {}]
  %s4 = inlined_call_operand.vmem [shape: f32[8,72], index: 4, kind: input, shape index: {}]
  %s5 = inlined_call_operand.vmem [shape: f32[8,1], index: 5, kind: input, shape index: {}]
  %s6 = inlined_call_operand.vmem [shape: f32[8,80], index: 6, kind: input, shape index: {}]
  %s7 = inlined_call_operand.vmem [shape: f32[8,1], index: 7, kind: input, shape index: {}]
  %s8 = inlined_call_operand.hbm [shape: f32[2,8,1024], index: 8, kind: output, shape index: {}]
  %s9 = sld [smem:[#allocation0]]
  $region73: #{tpu_custom_call.1} parent=0
    _
  %s11 = ssub.s32 1, %s9
  %s12 = scalar_select 0, %s11, %s9
  $region1: #{tpu_custom_call.1} parent=0
    #allocation2 [shape = 'u8[65536]{0}', space=vmem, size = 0x10000, scoped, tag = 'input window, operand 0']
    #allocation3 [shape = 's32[2]{0}', space=sflag, size = 0x8, scoped, tag = 'scoped memory for tpu_custom_call.1']
    #allocation4 [shape = 's32[2]{0}', space=sflag, size = 0x8, scoped, tag = 'scoped memory for tpu_custom_call.1']
    #allocation5 [shape = 'u8[65536]{0}', space=vmem, size = 0x10000, scoped, tag = 'input window, operand 1, single buffered']
    #allocation6 [shape = 's32[1]{0}', space=sflag, size = 0x4, scoped, tag = 'scoped memory for tpu_custom_call.1']
    #allocation7 [shape = 'u8[65536]{0}', space=vmem, size = 0x10000, scoped, tag = 'output window, operand 0']
    %13 = vsyncpa [#allocation3], 0
    %s14 = scalar_lea.sflag [#allocation3], 1
    %15 = vsyncpa %s14, 0
    %16 = vsyncpa [#allocation6], 0
    %17 = vsyncpa [#allocation4], 0
    %s18 = scalar_lea.sflag [#allocation4], 1
    %19 = vsyncpa %s18, 0
    loop: start=0, step=1, limit=4
    $region2: #{tpu_custom_call.1} parent=1 // loop_pre_header
      _
    $region3: #{tpu_custom_call.1} parent=1 // loop_header
      %s21 = sphi 0, %s25
      %p22 = scmp.ge.s32.totalorder %s21, 4
      %s31 = sphi 0, %s33
      %s34 = sphi 0, %s31
      %s35 = sphi 0, %s34
      %s51 = sphi 0, %s35
      %s55 = sphi 0, %s55
      %s57 = sphi 0, %s55
      %s58 = sphi 0, %s57
      %s72 = sphi 0, %s58
      %s76 = sphi 0, %s76
      %s78 = sphi 0, %s76
      %s79 = sphi 0, %s78
      %s93 = sphi 0, %s79
      %s97 = sphi 0, %s97
      %s99 = sphi 0, %s97
      %s100 = sphi 0, %s99
      %s114 = sphi 0, %s100
      %s118 = sphi 0, %s118
      %s120 = sphi 0, %s118
      %s121 = sphi 0, %s120
      %s135 = sphi 0, %s121
      %s139 = sphi 0, %s139
      %s141 = sphi 0, %s139
      %s142 = sphi 0, %s141
      %s156 = sphi 0, %s142
      %s160 = sphi 0, %s160
      %s162 = sphi 0, %s160
      %s163 = sphi 0, %s162
      %s177 = sphi 0, %s163
      %s181 = sphi 0, %s181
      %s183 = sphi 0, %s181
      %s184 = sphi 0, %s183
      %s198 = sphi 0, %s184
      %s204 = sphi 0, %s206
      %s207 = sphi 0, %s204
      %s208 = sphi 0, %s207
      %s224 = sphi 0, %s208
    $region4: #{tpu_custom_call.1} parent=1 // loop_header_branch
      %24 = sbr.rel (%p22) target = $region8
    $region5: #{tpu_custom_call.1} parent=1 // loop_body
      %s26 = ssub.s32 %s21, 1
      %s27 = ssub.s32 %s21, 2
      %s28 = sadd.s32 %s21, 1
      %s29 = ssub.s32 %s21, %s28
      %p30 = scmp.eq.s32.totalorder %s29, 0
      %s32 = sadd.s32 %s31, 1
      %s33 = scalar_select %p30, %s31, %s32
      %p36 = pneg %p30
      %p37 = scmp.eq.s32.totalorder %s21, 1
      %p38 = por %p36, %p37
      %p39 = scmp.ne.s32.totalorder %s31, %s34
      %p40 = scmp.eq.s32.totalorder %s21, 0
      %p41 = por %p39, %p40
      %p42 = scmp.ne.s32.totalorder %s31, %s34
      %p43 = scmp.eq.s32.totalorder %s26, 1
      %p44 = por %p42, %p43
      %p45 = scmp.ne.s32.totalorder %s34, %s35
      %p46 = scmp.eq.s32.totalorder %s26, 0
      %p47 = por %p45, %p46
      %p48 = scmp.ne.s32.totalorder %s34, %s35
      %p49 = scmp.eq.s32.totalorder %s27, 1
      %p50 = por %p48, %p49
      %p52 = scmp.ne.s32.totalorder %s35, %s51
      %p53 = scmp.eq.s32.totalorder %s27, 0
      %p54 = por %p52, %p53
      %s56 = sadd.s32 %s55, 1
      %p59 = scmp.eq.s32.totalorder %s21, 1
      %p60 = scmp.ne.s32.totalorder %s55, %s57
      %p61 = scmp.eq.s32.totalorder %s21, 0
      %p62 = por %p60, %p61
      %p63 = scmp.ne.s32.totalorder %s55, %s57
      %p64 = scmp.eq.s32.totalorder %s26, 1
      %p65 = por %p63, %p64
      %p66 = scmp.ne.s32.totalorder %s57, %s58
      %p67 = scmp.eq.s32.totalorder %s26, 0
      %p68 = por %p66, %p67
      %p69 = scmp.ne.s32.totalorder %s57, %s58
      %p70 = scmp.eq.s32.totalorder %s27, 1
      %p71 = por %p69, %p70
      %p73 = scmp.ne.s32.totalorder %s58, %s72
      %p74 = scmp.eq.s32.totalorder %s27, 0
      %p75 = por %p73, %p74
      %s77 = sadd.s32 %s76, 1
      %p80 = scmp.eq.s32.totalorder %s21, 1
      %p81 = scmp.ne.s32.totalorder %s76, %s78
      %p82 = scmp.eq.s32.totalorder %s21, 0
      %p83 = por %p81, %p82
      %p84 = scmp.ne.s32.totalorder %s76, %s78
      %p85 = scmp.eq.s32.totalorder %s26, 1
      %p86 = por %p84, %p85
      %p87 = scmp.ne.s32.totalorder %s78, %s79
      %p88 = scmp.eq.s32.totalorder %s26, 0
      %p89 = por %p87, %p88
      %p90 = scmp.ne.s32.totalorder %s78, %s79
      %p91 = scmp.eq.s32.totalorder %s27, 1
      %p92 = por %p90, %p91
      %p94 = scmp.ne.s32.totalorder %s79, %s93
      %p95 = scmp.eq.s32.totalorder %s27, 0
      %p96 = por %p94, %p95
      %s98 = sadd.s32 %s97, 1
      %p101 = scmp.eq.s32.totalorder %s21, 1
      %p102 = scmp.ne.s32.totalorder %s97, %s99
      %p103 = scmp.eq.s32.totalorder %s21, 0
      %p104 = por %p102, %p103
      %p105 = scmp.ne.s32.totalorder %s97, %s99
      %p106 = scmp.eq.s32.totalorder %s26, 1
      %p107 = por %p105, %p106
      %p108 = scmp.ne.s32.totalorder %s99, %s100
      %p109 = scmp.eq.s32.totalorder %s26, 0
      %p110 = por %p108, %p109
      %p111 = scmp.ne.s32.totalorder %s99, %s100
      %p112 = scmp.eq.s32.totalorder %s27, 1
      %p113 = por %p111, %p112
      %p115 = scmp.ne.s32.totalorder %s100, %s114
      %p116 = scmp.eq.s32.totalorder %s27, 0
      %p117 = por %p115, %p116
      %s119 = sadd.s32 %s118, 1
      %p122 = scmp.eq.s32.totalorder %s21, 1
      %p123 = scmp.ne.s32.totalorder %s118, %s120
      %p124 = scmp.eq.s32.totalorder %s21, 0
      %p125 = por %p123, %p124
      %p126 = scmp.ne.s32.totalorder %s118, %s120
      %p127 = scmp.eq.s32.totalorder %s26, 1
      %p128 = por %p126, %p127
      %p129 = scmp.ne.s32.totalorder %s120, %s121
      %p130 = scmp.eq.s32.totalorder %s26, 0
      %p131 = por %p129, %p130
      %p132 = scmp.ne.s32.totalorder %s120, %s121
      %p133 = scmp.eq.s32.totalorder %s27, 1
      %p134 = por %p132, %p133
      %p136 = scmp.ne.s32.totalorder %s121, %s135
      %p137 = scmp.eq.s32.totalorder %s27, 0
      %p138 = por %p136, %p137
      %s140 = sadd.s32 %s139, 1
      %p143 = scmp.eq.s32.totalorder %s21, 1
      %p144 = scmp.ne.s32.totalorder %s139, %s141
      %p145 = scmp.eq.s32.totalorder %s21, 0
      %p146 = por %p144, %p145
      %p147 = scmp.ne.s32.totalorder %s139, %s141
      %p148 = scmp.eq.s32.totalorder %s26, 1
      %p149 = por %p147, %p148
      %p150 = scmp.ne.s32.totalorder %s141, %s142
      %p151 = scmp.eq.s32.totalorder %s26, 0
      %p152 = por %p150, %p151
      %p153 = scmp.ne.s32.totalorder %s141, %s142
      %p154 = scmp.eq.s32.totalorder %s27, 1
      %p155 = por %p153, %p154
      %p157 = scmp.ne.s32.totalorder %s142, %s156
      %p158 = scmp.eq.s32.totalorder %s27, 0
      %p159 = por %p157, %p158
      %s161 = sadd.s32 %s160, 1
      %p164 = scmp.eq.s32.totalorder %s21, 1
      %p165 = scmp.ne.s32.totalorder %s160, %s162
      %p166 = scmp.eq.s32.totalorder %s21, 0
      %p167 = por %p165, %p166
      %p168 = scmp.ne.s32.totalorder %s160, %s162
      %p169 = scmp.eq.s32.totalorder %s26, 1
      %p170 = por %p168, %p169
      %p171 = scmp.ne.s32.totalorder %s162, %s163
      %p172 = scmp.eq.s32.totalorder %s26, 0
      %p173 = por %p171, %p172
      %p174 = scmp.ne.s32.totalorder %s162, %s163
      %p175 = scmp.eq.s32.totalorder %s27, 1
      %p176 = por %p174, %p175
      %p178 = scmp.ne.s32.totalorder %s163, %s177
      %p179 = scmp.eq.s32.totalorder %s27, 0
      %p180 = por %p178, %p179
      %s182 = sadd.s32 %s181, 1
      %p185 = scmp.eq.s32.totalorder %s21, 1
      %p186 = scmp.ne.s32.totalorder %s181, %s183
      %p187 = scmp.eq.s32.totalorder %s21, 0
      %p188 = por %p186, %p187
      %p189 = scmp.ne.s32.totalorder %s181, %s183
      %p190 = scmp.eq.s32.totalorder %s26, 1
      %p191 = por %p189, %p190
      %p192 = scmp.ne.s32.totalorder %s183, %s184
      %p193 = scmp.eq.s32.totalorder %s26, 0
      %p194 = por %p192, %p193
      %p195 = scmp.ne.s32.totalorder %s183, %s184
      %p196 = scmp.eq.s32.totalorder %s27, 1
      %p197 = por %p195, %p196
      %p199 = scmp.ne.s32.totalorder %s184, %s198
      %p200 = scmp.eq.s32.totalorder %s27, 0
      %p201 = por %p199, %p200
      %s202 = ssub.s32 %s21, %s28
      %p203 = scmp.eq.s32.totalorder %s202, 0
      %s205 = sadd.s32 %s204, 1
      %s206 = scalar_select %p203, %s204, %s205
      %p209 = pneg %p203
      %p210 = scmp.eq.s32.totalorder %s21, 1
      %p211 = por %p209, %p210
      %p212 = scmp.ne.s32.totalorder %s204, %s207
      %p213 = scmp.eq.s32.totalorder %s21, 0
      %p214 = por %p212, %p213
      %p215 = scmp.ne.s32.totalorder %s204, %s207
      %p216 = scmp.eq.s32.totalorder %s26, 1
      %p217 = por %p215, %p216
      %p218 = scmp.ne.s32.totalorder %s207, %s208
      %p219 = scmp.eq.s32.totalorder %s26, 0
      %p220 = por %p218, %p219
      %p221 = scmp.ne.s32.totalorder %s207, %s208
      %p222 = scmp.eq.s32.totalorder %s27, 1
      %p223 = por %p221, %p222
      %p225 = scmp.ne.s32.totalorder %s208, %s224
      %p226 = scmp.eq.s32.totalorder %s27, 0
      %p227 = por %p225, %p226
      %p228 = scmp.le.s32.totalorder 1, %s21
      %p229 = scmp.lt.s32.totalorder %s21, 3
      %p230 = pnand %p228, %p229
      %p231 = pneg %p230
      // Predicated region
      $region9: #{tpu_custom_call.1} parent=5 // pred_check
        _
      $region10: #{tpu_custom_call.1} parent=5 // pred_check_branch
        %233 = sbr.rel (%p230) target = $region12
      $region11: #{tpu_custom_call.1} parent=5 // pred_region
        %s234 = ssub.s32 %s21, 1
        // Predicated region
        $region13: #{tpu_custom_call.1} parent=11 // pred_check
          %p235 = pneg %p68
        $region14: #{tpu_custom_call.1} parent=11 // pred_check_branch
          %237 = sbr.rel (%p235) target = $region16
        $region15: #{tpu_custom_call.1} parent=11 // pred_region
          %s239 = ssub.s32 2048, 2048
          %240 = vsyncadd [#allocation6], %s239
          %s241 = sshll.u32 [#allocation5], 4
          %s242 = int_to_ptr.vmem [resolvable:$true] %s241
          %247 = dma.hbm_to_vmem [thread:$0]  %s1, 2048, %s242, [#allocation6], 1024, 1024, 64
        $region16: #{tpu_custom_call.1} parent=11 // pred_fallthru
          _
        // Predicated region
        $region17: #{tpu_custom_call.1} parent=11 // pred_check
          %p248 = pneg %p89
        $region18: #{tpu_custom_call.1} parent=11 // pred_check_branch
          %250 = sbr.rel (%p248) target = $region20
        $region19: #{tpu_custom_call.1} parent=11 // pred_region
          _
        $region20: #{tpu_custom_call.1} parent=11 // pred_fallthru
          _
        // Predicated region
        $region21: #{tpu_custom_call.1} parent=11 // pred_check
          %p251 = pneg %p110
        $region22: #{tpu_custom_call.1} parent=11 // pred_check_branch
          %253 = sbr.rel (%p251) target = $region24
        $region23: #{tpu_custom_call.1} parent=11 // pred_region
          _
        $region24: #{tpu_custom_call.1} parent=11 // pred_fallthru
          _
        // Predicated region
        $region25: #{tpu_custom_call.1} parent=11 // pred_check
          %p254 = pneg %p131
        $region26: #{tpu_custom_call.1} parent=11 // pred_check_branch
          %256 = sbr.rel (%p254) target = $region28
        $region27: #{tpu_custom_call.1} parent=11 // pred_region
          _
        $region28: #{tpu_custom_call.1} parent=11 // pred_fallthru
          _
        // Predicated region
        $region29: #{tpu_custom_call.1} parent=11 // pred_check
          %p257 = pneg %p152
        $region30: #{tpu_custom_call.1} parent=11 // pred_check_branch
          %259 = sbr.rel (%p257) target = $region32
        $region31: #{tpu_custom_call.1} parent=11 // pred_region
          _
        $region32: #{tpu_custom_call.1} parent=11 // pred_fallthru
          _
        // Predicated region
        $region33: #{tpu_custom_call.1} parent=11 // pred_check
          %p260 = pneg %p173
        $region34: #{tpu_custom_call.1} parent=11 // pred_check_branch
          %262 = sbr.rel (%p260) target = $region36
        $region35: #{tpu_custom_call.1} parent=11 // pred_region
          _
        $region36: #{tpu_custom_call.1} parent=11 // pred_fallthru
          _
        // Predicated region
        $region37: #{tpu_custom_call.1} parent=11 // pred_check
          %p263 = pneg %p194
        $region38: #{tpu_custom_call.1} parent=11 // pred_check_branch
          %265 = sbr.rel (%p263) target = $region40
        $region39: #{tpu_custom_call.1} parent=11 // pred_region
          _
        $region40: #{tpu_custom_call.1} parent=11 // pred_fallthru
          _
      $region12: #{tpu_custom_call.1} parent=5 // pred_fallthru
        _
      %p266 = scmp.lt.s32.totalorder %s21, 2
      // Predicated region
      $region41: #{tpu_custom_call.1} parent=5 // pred_check
        %p267 = pneg %p266
      $region42: #{tpu_custom_call.1} parent=5 // pred_check_branch
        %269 = sbr.rel (%p267) target = $region44
      $region43: #{tpu_custom_call.1} parent=5 // pred_region
        // Predicated region
        $region45: #{tpu_custom_call.1} parent=43 // pred_check
          %p270 = pneg %p41
        $region46: #{tpu_custom_call.1} parent=43 // pred_check_branch
          %272 = sbr.rel (%p270) target = $region48
        $region47: #{tpu_custom_call.1} parent=43 // pred_region
          %s273 = sand.u32 %s31, 1
          %s274 = scalar_lea.sflag [#allocation3], %s273
          %s275 = sand.u32 %s31, 1
          %s276 = smul.addr %s275, 64
          %s277 = scalar_lea.vmem [#allocation2], %s276
          %s279 = ssub.s32 1024, 1024
          %280 = vsyncadd %s274, %s279
          %s281 = smul.addr %s21, 8
          %s282 = smul.addr %s281, 128
          %s283 = scalar_lea.hbm %s0, %s282
          %s285 = sshll.u32 %s277, 4
          %s286 = int_to_ptr.vmem [resolvable:$true] %s285
          %288 = dma.hbm_to_vmem [thread:$0]  %s283, 1024, %s286, %s274
        $region48: #{tpu_custom_call.1} parent=43 // pred_fallthru
          _
      $region44: #{tpu_custom_call.1} parent=5 // pred_fallthru
        _
      %p289 = scmp.le.s32.totalorder 1, %s21
      %p290 = scmp.lt.s32.totalorder %s21, 3
      %p291 = pnand %p289, %p290
      %p292 = pneg %p291
      // Predicated region
      $region49: #{tpu_custom_call.1} parent=5 // pred_check
        _
      $region50: #{tpu_custom_call.1} parent=5 // pred_check_branch
        %294 = sbr.rel (%p291) target = $region52
      $region51: #{tpu_custom_call.1} parent=5 // pred_region
        %s295 = ssub.s32 %s21, 1
        %s296 = sand.u32 %s34, 1
        %s297 = scalar_lea.sflag [#allocation3], %s296
        %s298 = sand.u32 %s34, 1
        %s299 = smul.addr %s298, 64
        %s300 = scalar_lea.vmem [#allocation2], %s299
        // Predicated region
        $region53: #{tpu_custom_call.1} parent=51 // pred_check
          %p301 = pneg %p47
        $region54: #{tpu_custom_call.1} parent=51 // pred_check_branch
          %303 = sbr.rel (%p301) target = $region56
        $region55: #{tpu_custom_call.1} parent=51 // pred_region
          %304 = dma.done %s297, 1024
        $region56: #{tpu_custom_call.1} parent=51 // pred_fallthru
          _
        // Predicated region
        $region57: #{tpu_custom_call.1} parent=51 // pred_check
          %p305 = pneg %p68
        $region58: #{tpu_custom_call.1} parent=51 // pred_check_branch
          %307 = sbr.rel (%p305) target = $region60
        $region59: #{tpu_custom_call.1} parent=51 // pred_region
          %308 = dma.done [#allocation6], 2048
        $region60: #{tpu_custom_call.1} parent=51 // pred_fallthru
          _
        %s309 = sand.u32 %s34, 1
        %s310 = scalar_lea.sflag [#allocation3], %s309
        %s311 = sand.u32 %s34, 1
        %s312 = smul.addr %s311, 64
        %s313 = scalar_lea.vmem [#allocation2], %s312
        %p314 = pneg %p47
        %p315 = pneg %p44
        %p316 = pneg %p68
        %p317 = pneg %p65
        %p318 = pneg %p89
        %p319 = pneg %p86
        %p320 = pneg %p110
        %p321 = pneg %p107
        %p322 = pneg %p131
        %p323 = pneg %p128
        %p324 = pneg %p152
        %p325 = pneg %p149
        %p326 = pneg %p173
        %p327 = pneg %p170
        %p328 = pneg %p194
        %p329 = pneg %p191
        %p330 = pneg %p220
        %p331 = pneg %p217
        %s332 = sand.u32 %s207, 1
        %s333 = scalar_lea.sflag [#allocation4], %s332
        %s334 = sand.u32 %s207, 1
        %s335 = smul.addr %s334, 64
        %s336 = scalar_lea.vmem [#allocation7], %s335
        %v337 = vld [vmem:[%s300] sm:$0xff]
        %v338 = vld [vmem:[%s300 + $0x8] sm:$0xff]
        %v339 = vld [vmem:[%s300 + $0x10] sm:$0xff]
        %v340 = vld [vmem:[%s300 + $0x18] sm:$0xff]
        %v341 = vld [vmem:[%s300 + $0x20] sm:$0xff]
        %v342 = vld [vmem:[%s300 + $0x28] sm:$0xff]
        %v343 = vld [vmem:[%s300 + $0x30] sm:$0xff]
        %v344 = vld [vmem:[%s300 + $0x38] sm:$0xff]
        %v345 = vld [vmem:[#allocation5] ss:$8 sm:$0xf]
        %v346 = vld [vmem:[#allocation5] ss:$8 sm:$0xf0]
        %v347 = vor.u32 %v345, %v346
        %v349 = vlaneseq
        %v350 = vshrl.u32 %v349, 7
        %v351 = vsub.s32 0, %v350
        %v352 = vrot.slane %v347, %v351
        %v353 = vlaneseq
        %v354 = vshrl.u32 %v353, 7
        %v355 = vsub.s32 1, %v354
        %v356 = vrot.slane %v347, %v355
        %v357 = vlaneseq
        %v358 = vshrl.u32 %v357, 7
        %v359 = vsub.s32 2, %v358
        %v360 = vrot.slane %v347, %v359
        %v361 = vlaneseq
        %v362 = vshrl.u32 %v361, 7
        %v363 = vsub.s32 3, %v362
        %v364 = vrot.slane %v347, %v363
        %v365 = vlaneseq
        %v366 = vshrl.u32 %v365, 7
        %v367 = vsub.s32 4, %v366
        %v368 = vrot.slane %v347, %v367
        %v369 = vlaneseq
        %v370 = vshrl.u32 %v369, 7
        %v371 = vsub.s32 5, %v370
        %v372 = vrot.slane %v347, %v371
        %v373 = vlaneseq
        %v374 = vshrl.u32 %v373, 7
        %v375 = vsub.s32 6, %v374
        %v376 = vrot.slane %v347, %v375
        %v377 = vlaneseq
        %v378 = vshrl.u32 %v377, 7
        %v379 = vsub.s32 7, %v378
        %v380 = vrot.slane %v347, %v379
        %s389 = scalar_lea.vmem [#allocation5], 1
        %v390 = vld [vmem:[%s389] ss:$8 sm:$0xf]
        %v391 = vld [vmem:[%s389] ss:$8 sm:$0xf0]
        %v392 = vor.u32 %v390, %v391
        %v394 = vlaneseq
        %v395 = vshrl.u32 %v394, 7
        %v396 = vsub.s32 0, %v395
        %v397 = vrot.slane %v392, %v396
        %v398 = vlaneseq
        %v399 = vshrl.u32 %v398, 7
        %v400 = vsub.s32 1, %v399
        %v401 = vrot.slane %v392, %v400
        %v402 = vlaneseq
        %v403 = vshrl.u32 %v402, 7
        %v404 = vsub.s32 2, %v403
        %v405 = vrot.slane %v392, %v404
        %v406 = vlaneseq
        %v407 = vshrl.u32 %v406, 7
        %v408 = vsub.s32 3, %v407
        %v409 = vrot.slane %v392, %v408
        %v410 = vlaneseq
        %v411 = vshrl.u32 %v410, 7
        %v412 = vsub.s32 4, %v411
        %v413 = vrot.slane %v392, %v412
        %v414 = vlaneseq
        %v415 = vshrl.u32 %v414, 7
        %v416 = vsub.s32 5, %v415
        %v417 = vrot.slane %v392, %v416
        %v418 = vlaneseq
        %v419 = vshrl.u32 %v418, 7
        %v420 = vsub.s32 6, %v419
        %v421 = vrot.slane %v392, %v420
        %v422 = vlaneseq
        %v423 = vshrl.u32 %v422, 7
        %v424 = vsub.s32 7, %v423
        %v425 = vrot.slane %v392, %v424
        %s434 = scalar_lea.vmem [#allocation5], 2
        %v435 = vld [vmem:[%s434] ss:$8 sm:$0xf]
        %v436 = vld [vmem:[%s434] ss:$8 sm:$0xf0]
        %v437 = vor.u32 %v435, %v436
        %v439 = vlaneseq
        %v440 = vshrl.u32 %v439, 7
        %v441 = vsub.s32 0, %v440
        %v442 = vrot.slane %v437, %v441
        %v443 = vlaneseq
        %v444 = vshrl.u32 %v443, 7
        %v445 = vsub.s32 1, %v444
        %v446 = vrot.slane %v437, %v445
        %v447 = vlaneseq
        %v448 = vshrl.u32 %v447, 7
        %v449 = vsub.s32 2, %v448
        %v450 = vrot.slane %v437, %v449
        %v451 = vlaneseq
        %v452 = vshrl.u32 %v451, 7
        %v453 = vsub.s32 3, %v452
        %v454 = vrot.slane %v437, %v453
        %v455 = vlaneseq
        %v456 = vshrl.u32 %v455, 7
        %v457 = vsub.s32 4, %v456
        %v458 = vrot.slane %v437, %v457
        %v459 = vlaneseq
        %v460 = vshrl.u32 %v459, 7
        %v461 = vsub.s32 5, %v460
        %v462 = vrot.slane %v437, %v461
        %v463 = vlaneseq
        %v464 = vshrl.u32 %v463, 7
        %v465 = vsub.s32 6, %v464
        %v466 = vrot.slane %v437, %v465
        %v467 = vlaneseq
        %v468 = vshrl.u32 %v467, 7
        %v469 = vsub.s32 7, %v468
        %v470 = vrot.slane %v437, %v469
        %s479 = scalar_lea.vmem [#allocation5], 3
        %v480 = vld [vmem:[%s479] ss:$8 sm:$0xf]
        %v481 = vld [vmem:[%s479] ss:$8 sm:$0xf0]
        %v482 = vor.u32 %v480, %v481
        %v484 = vlaneseq
        %v485 = vshrl.u32 %v484, 7
        %v486 = vsub.s32 0, %v485
        %v487 = vrot.slane %v482, %v486
        %v488 = vlaneseq
        %v489 = vshrl.u32 %v488, 7
        %v490 = vsub.s32 1, %v489
        %v491 = vrot.slane %v482, %v490
        %v492 = vlaneseq
        %v493 = vshrl.u32 %v492, 7
        %v494 = vsub.s32 2, %v493
        %v495 = vrot.slane %v482, %v494
        %v496 = vlaneseq
        %v497 = vshrl.u32 %v496, 7
        %v498 = vsub.s32 3, %v497
        %v499 = vrot.slane %v482, %v498
        %v500 = vlaneseq
        %v501 = vshrl.u32 %v500, 7
        %v502 = vsub.s32 4, %v501
        %v503 = vrot.slane %v482, %v502
        %v504 = vlaneseq
        %v505 = vshrl.u32 %v504, 7
        %v506 = vsub.s32 5, %v505
        %v507 = vrot.slane %v482, %v506
        %v508 = vlaneseq
        %v509 = vshrl.u32 %v508, 7
        %v510 = vsub.s32 6, %v509
        %v511 = vrot.slane %v482, %v510
        %v512 = vlaneseq
        %v513 = vshrl.u32 %v512, 7
        %v514 = vsub.s32 7, %v513
        %v515 = vrot.slane %v482, %v514
        %s524 = scalar_lea.vmem [#allocation5], 5
        %v525 = vld [vmem:[%s524] ss:$8 sm:$0xf]
        %v526 = vld [vmem:[%s524] ss:$8 sm:$0xf0]
        %v527 = vor.u32 %v525, %v526
        %v529 = vlaneseq
        %v530 = vshrl.u32 %v529, 7
        %v531 = vsub.s32 0, %v530
        %v532 = vrot.slane %v527, %v531
        %v533 = vlaneseq
        %v534 = vshrl.u32 %v533, 7
        %v535 = vsub.s32 1, %v534
        %v536 = vrot.slane %v527, %v535
        %v537 = vlaneseq
        %v538 = vshrl.u32 %v537, 7
        %v539 = vsub.s32 2, %v538
        %v540 = vrot.slane %v527, %v539
        %v541 = vlaneseq
        %v542 = vshrl.u32 %v541, 7
        %v543 = vsub.s32 3, %v542
        %v544 = vrot.slane %v527, %v543
        %v545 = vlaneseq
        %v546 = vshrl.u32 %v545, 7
        %v547 = vsub.s32 4, %v546
        %v548 = vrot.slane %v527, %v547
        %v549 = vlaneseq
        %v550 = vshrl.u32 %v549, 7
        %v551 = vsub.s32 5, %v550
        %v552 = vrot.slane %v527, %v551
        %v553 = vlaneseq
        %v554 = vshrl.u32 %v553, 7
        %v555 = vsub.s32 6, %v554
        %v556 = vrot.slane %v527, %v555
        %v557 = vlaneseq
        %v558 = vshrl.u32 %v557, 7
        %v559 = vsub.s32 7, %v558
        %v560 = vrot.slane %v527, %v559
        %s569 = scalar_lea.vmem [#allocation5], 6
        %v570 = vld [vmem:[%s569] ss:$8 sm:$0xf]
        %v571 = vld [vmem:[%s569] ss:$8 sm:$0xf0]
        %v572 = vor.u32 %v570, %v571
        %v574 = vlaneseq
        %v575 = vshrl.u32 %v574, 7
        %v576 = vsub.s32 0, %v575
        %v577 = vrot.slane %v572, %v576
        %v578 = vlaneseq
        %v579 = vshrl.u32 %v578, 7
        %v580 = vsub.s32 1, %v579
        %v581 = vrot.slane %v572, %v580
        %v582 = vlaneseq
        %v583 = vshrl.u32 %v582, 7
        %v584 = vsub.s32 2, %v583
        %v585 = vrot.slane %v572, %v584
        %v586 = vlaneseq
        %v587 = vshrl.u32 %v586, 7
        %v588 = vsub.s32 3, %v587
        %v589 = vrot.slane %v572, %v588
        %v590 = vlaneseq
        %v591 = vshrl.u32 %v590, 7
        %v592 = vsub.s32 4, %v591
        %v593 = vrot.slane %v572, %v592
        %v594 = vlaneseq
        %v595 = vshrl.u32 %v594, 7
        %v596 = vsub.s32 5, %v595
        %v597 = vrot.slane %v572, %v596
        %v598 = vlaneseq
        %v599 = vshrl.u32 %v598, 7
        %v600 = vsub.s32 6, %v599
        %v601 = vrot.slane %v572, %v600
        %v602 = vlaneseq
        %v603 = vshrl.u32 %v602, 7
        %v604 = vsub.s32 7, %v603
        %v605 = vrot.slane %v572, %v604
        %s614 = scalar_lea.vmem [#allocation5], 7
        %v615 = vld [vmem:[%s614] ss:$8 sm:$0xf]
        %v616 = vld [vmem:[%s614] ss:$8 sm:$0xf0]
        %v617 = vor.u32 %v615, %v616
        %v619 = vlaneseq
        %v620 = vshrl.u32 %v619, 7
        %v621 = vsub.s32 0, %v620
        %v622 = vrot.slane %v617, %v621
        %v623 = vlaneseq
        %v624 = vshrl.u32 %v623, 7
        %v625 = vsub.s32 1, %v624
        %v626 = vrot.slane %v617, %v625
        %v627 = vlaneseq
        %v628 = vshrl.u32 %v627, 7
        %v629 = vsub.s32 2, %v628
        %v630 = vrot.slane %v617, %v629
        %v631 = vlaneseq
        %v632 = vshrl.u32 %v631, 7
        %v633 = vsub.s32 3, %v632
        %v634 = vrot.slane %v617, %v633
        %v635 = vlaneseq
        %v636 = vshrl.u32 %v635, 7
        %v637 = vsub.s32 4, %v636
        %v638 = vrot.slane %v617, %v637
        %v639 = vlaneseq
        %v640 = vshrl.u32 %v639, 7
        %v641 = vsub.s32 5, %v640
        %v642 = vrot.slane %v617, %v641
        %v643 = vlaneseq
        %v644 = vshrl.u32 %v643, 7
        %v645 = vsub.s32 6, %v644
        %v646 = vrot.slane %v617, %v645
        %v647 = vlaneseq
        %v648 = vshrl.u32 %v647, 7
        %v649 = vsub.s32 7, %v648
        %v650 = vrot.slane %v617, %v649
        %s659 = scalar_lea.vmem [#allocation5], 64
        %v660 = vld [vmem:[%s659] ss:$8 sm:$0xf]
        %v661 = vld [vmem:[%s659] ss:$8 sm:$0xf0]
        %v662 = vor.u32 %v660, %v661
        %v664 = vlaneseq
        %v665 = vshrl.u32 %v664, 7
        %v666 = vsub.s32 0, %v665
        %v667 = vrot.slane %v662, %v666
        %v668 = vlaneseq
        %v669 = vshrl.u32 %v668, 7
        %v670 = vsub.s32 1, %v669
        %v671 = vrot.slane %v662, %v670
        %v672 = vlaneseq
        %v673 = vshrl.u32 %v672, 7
        %v674 = vsub.s32 2, %v673
        %v675 = vrot.slane %v662, %v674
        %v676 = vlaneseq
        %v677 = vshrl.u32 %v676, 7
        %v678 = vsub.s32 3, %v677
        %v679 = vrot.slane %v662, %v678
        %v680 = vlaneseq
        %v681 = vshrl.u32 %v680, 7
        %v682 = vsub.s32 4, %v681
        %v683 = vrot.slane %v662, %v682
        %v684 = vlaneseq
        %v685 = vshrl.u32 %v684, 7
        %v686 = vsub.s32 5, %v685
        %v687 = vrot.slane %v662, %v686
        %v688 = vlaneseq
        %v689 = vshrl.u32 %v688, 7
        %v690 = vsub.s32 6, %v689
        %v691 = vrot.slane %v662, %v690
        %v692 = vlaneseq
        %v693 = vshrl.u32 %v692, 7
        %v694 = vsub.s32 7, %v693
        %v695 = vrot.slane %v662, %v694
        %704 = vrot.lane.b32.xlu0 %v337, 17
        %v705 = vpop.permute.xlu0 %704
        %706 = vrot.lane.b32.xlu0 %v338, 17
        %v707 = vpop.permute.xlu0 %706
        %708 = vrot.lane.b32.xlu0 %v339, 17
        %v709 = vpop.permute.xlu0 %708
        %710 = vrot.lane.b32.xlu0 %v340, 17
        %v711 = vpop.permute.xlu0 %710
        %712 = vrot.lane.b32.xlu0 %v341, 17
        %v713 = vpop.permute.xlu0 %712
        %714 = vrot.lane.b32.xlu0 %v342, 17
        %v715 = vpop.permute.xlu0 %714
        %716 = vrot.lane.b32.xlu0 %v343, 17
        %v717 = vpop.permute.xlu0 %716
        %718 = vrot.lane.b32.xlu0 %v344, 17
        %v719 = vpop.permute.xlu0 %718
        %v720 = vlaneseq
        %v721 = vand.u32 %v720, 127
        %vm722 = vcmp.lt.s32.totalorder %v721, 17
        %v723 = vsel %vm722, %v717, %v719
        %v724 = vsel %vm722, %v715, %v717
        %v725 = vsel %vm722, %v713, %v715
        %v726 = vsel %vm722, %v711, %v713
        %v727 = vsel %vm722, %v709, %v711
        %v728 = vsel %vm722, %v707, %v709
        %v729 = vsel %vm722, %v705, %v707
        %v730 = vsel %vm722, %v719, %v705
        %v731 = vmul.f32 %v730, %v352
        %v732 = vmul.f32 %v729, %v356
        %v733 = vmul.f32 %v728, %v360
        %v734 = vmul.f32 %v727, %v364
        %v735 = vmul.f32 %v726, %v368
        %v736 = vmul.f32 %v725, %v372
        %v737 = vmul.f32 %v724, %v376
        %v738 = vmul.f32 %v723, %v380
        %739 = vrot.lane.b32.xlu0 %v337, 16
        %v740 = vpop.permute.xlu0 %739
        %741 = vrot.lane.b32.xlu0 %v338, 16
        %v742 = vpop.permute.xlu0 %741
        %743 = vrot.lane.b32.xlu0 %v339, 16
        %v744 = vpop.permute.xlu0 %743
        %745 = vrot.lane.b32.xlu0 %v340, 16
        %v746 = vpop.permute.xlu0 %745
        %747 = vrot.lane.b32.xlu0 %v341, 16
        %v748 = vpop.permute.xlu0 %747
        %749 = vrot.lane.b32.xlu0 %v342, 16
        %v750 = vpop.permute.xlu0 %749
        %751 = vrot.lane.b32.xlu0 %v343, 16
        %v752 = vpop.permute.xlu0 %751
        %753 = vrot.lane.b32.xlu0 %v344, 16
        %v754 = vpop.permute.xlu0 %753
        %vm755 = vcmp.lt.s32.totalorder %v721, 16
        %v756 = vsel %vm755, %v752, %v754
        %v757 = vsel %vm755, %v750, %v752
        %v758 = vsel %vm755, %v748, %v750
        %v759 = vsel %vm755, %v746, %v748
        %v760 = vsel %vm755, %v744, %v746
        %v761 = vsel %vm755, %v742, %v744
        %v762 = vsel %vm755, %v740, %v742
        %v763 = vsel %vm755, %v754, %v740
        %v764 = vmul.f32 %v763, %v397
        %v765 = vmul.f32 %v762, %v401
        %v766 = vmul.f32 %v761, %v405
        %v767 = vmul.f32 %v760, %v409
        %v768 = vmul.f32 %v759, %v413
        %v769 = vmul.f32 %v758, %v417
        %v770 = vmul.f32 %v757, %v421
        %v771 = vmul.f32 %v756, %v425
        %772 = vrot.lane.b32.xlu0 %v337, 15
        %v773 = vpop.permute.xlu0 %772
        %774 = vrot.lane.b32.xlu0 %v338, 15
        %v775 = vpop.permute.xlu0 %774
        %776 = vrot.lane.b32.xlu0 %v339, 15
        %v777 = vpop.permute.xlu0 %776
        %778 = vrot.lane.b32.xlu0 %v340, 15
        %v779 = vpop.permute.xlu0 %778
        %780 = vrot.lane.b32.xlu0 %v341, 15
        %v781 = vpop.permute.xlu0 %780
        %782 = vrot.lane.b32.xlu0 %v342, 15
        %v783 = vpop.permute.xlu0 %782
        %784 = vrot.lane.b32.xlu0 %v343, 15
        %v785 = vpop.permute.xlu0 %784
        %786 = vrot.lane.b32.xlu0 %v344, 15
        %v787 = vpop.permute.xlu0 %786
        %vm788 = vcmp.lt.s32.totalorder %v721, 15
        %v789 = vsel %vm788, %v785, %v787
        %v790 = vsel %vm788, %v783, %v785
        %v791 = vsel %vm788, %v781, %v783
        %v792 = vsel %vm788, %v779, %v781
        %v793 = vsel %vm788, %v777, %v779
        %v794 = vsel %vm788, %v775, %v777
        %v795 = vsel %vm788, %v773, %v775
        %v796 = vsel %vm788, %v787, %v773
        %v797 = vmul.f32 %v796, %v442
        %v798 = vmul.f32 %v795, %v446
        %v799 = vmul.f32 %v794, %v450
        %v800 = vmul.f32 %v793, %v454
        %v801 = vmul.f32 %v792, %v458
        %v802 = vmul.f32 %v791, %v462
        %v803 = vmul.f32 %v790, %v466
        %v804 = vmul.f32 %v789, %v470
        %805 = vrot.lane.b32.xlu0 %v337, 1
        %v806 = vpop.permute.xlu0 %805
        %807 = vrot.lane.b32.xlu0 %v338, 1
        %v808 = vpop.permute.xlu0 %807
        %809 = vrot.lane.b32.xlu0 %v339, 1
        %v810 = vpop.permute.xlu0 %809
        %811 = vrot.lane.b32.xlu0 %v340, 1
        %v812 = vpop.permute.xlu0 %811
        %813 = vrot.lane.b32.xlu0 %v341, 1
        %v814 = vpop.permute.xlu0 %813
        %815 = vrot.lane.b32.xlu0 %v342, 1
        %v816 = vpop.permute.xlu0 %815
        %817 = vrot.lane.b32.xlu0 %v343, 1
        %v818 = vpop.permute.xlu0 %817
        %819 = vrot.lane.b32.xlu0 %v344, 1
        %v820 = vpop.permute.xlu0 %819
        %vm821 = vcmp.lt.s32.totalorder %v721, 1
        %v822 = vsel %vm821, %v818, %v820
        %v823 = vsel %vm821, %v816, %v818
        %v824 = vsel %vm821, %v814, %v816
        %v825 = vsel %vm821, %v812, %v814
        %v826 = vsel %vm821, %v810, %v812
        %v827 = vsel %vm821, %v808, %v810
        %v828 = vsel %vm821, %v806, %v808
        %v829 = vsel %vm821, %v820, %v806
        %v830 = vmul.f32 %v829, %v487
        %v831 = vmul.f32 %v828, %v491
        %v832 = vmul.f32 %v827, %v495
        %v833 = vmul.f32 %v826, %v499
        %v834 = vmul.f32 %v825, %v503
        %v835 = vmul.f32 %v824, %v507
        %v836 = vmul.f32 %v823, %v511
        %v837 = vmul.f32 %v822, %v515
        %838 = vrot.lane.b32.xlu0 %v337, 127
        %v839 = vpop.permute.xlu0 %838
        %840 = vrot.lane.b32.xlu0 %v338, 127
        %v841 = vpop.permute.xlu0 %840
        %842 = vrot.lane.b32.xlu0 %v339, 127
        %v843 = vpop.permute.xlu0 %842
        %844 = vrot.lane.b32.xlu0 %v340, 127
        %v845 = vpop.permute.xlu0 %844
        %846 = vrot.lane.b32.xlu0 %v341, 127
        %v847 = vpop.permute.xlu0 %846
        %848 = vrot.lane.b32.xlu0 %v342, 127
        %v849 = vpop.permute.xlu0 %848
        %850 = vrot.lane.b32.xlu0 %v343, 127
        %v851 = vpop.permute.xlu0 %850
        %852 = vrot.lane.b32.xlu0 %v344, 127
        %v853 = vpop.permute.xlu0 %852
        %vm854 = vcmp.lt.s32.totalorder %v721, 127
        %v855 = vsel %vm854, %v851, %v853
        %v856 = vsel %vm854, %v849, %v851
        %v857 = vsel %vm854, %v847, %v849
        %v858 = vsel %vm854, %v845, %v847
        %v859 = vsel %vm854, %v843, %v845
        %v860 = vsel %vm854, %v841, %v843
        %v861 = vsel %vm854, %v839, %v841
        %v862 = vsel %vm854, %v853, %v839
        %v863 = vmul.f32 %v861, %v532
        %v864 = vmul.f32 %v860, %v536
        %v865 = vmul.f32 %v859, %v540
        %v866 = vmul.f32 %v858, %v544
        %v867 = vmul.f32 %v857, %v548
        %v868 = vmul.f32 %v856, %v552
        %v869 = vmul.f32 %v855, %v556
        %v870 = vmul.f32 %v862, %v560
        %871 = vrot.lane.b32.xlu0 %v337, 113
        %v872 = vpop.permute.xlu0 %871
        %873 = vrot.lane.b32.xlu0 %v338, 113
        %v874 = vpop.permute.xlu0 %873
        %875 = vrot.lane.b32.xlu0 %v339, 113
        %v876 = vpop.permute.xlu0 %875
        %877 = vrot.lane.b32.xlu0 %v340, 113
        %v878 = vpop.permute.xlu0 %877
        %879 = vrot.lane.b32.xlu0 %v341, 113
        %v880 = vpop.permute.xlu0 %879
        %881 = vrot.lane.b32.xlu0 %v342, 113
        %v882 = vpop.permute.xlu0 %881
        %883 = vrot.lane.b32.xlu0 %v343, 113
        %v884 = vpop.permute.xlu0 %883
        %885 = vrot.lane.b32.xlu0 %v344, 113
        %v886 = vpop.permute.xlu0 %885
        %vm887 = vcmp.lt.s32.totalorder %v721, 113
        %v888 = vsel %vm887, %v884, %v886
        %v889 = vsel %vm887, %v882, %v884
        %v890 = vsel %vm887, %v880, %v882
        %v891 = vsel %vm887, %v878, %v880
        %v892 = vsel %vm887, %v876, %v878
        %v893 = vsel %vm887, %v874, %v876
        %v894 = vsel %vm887, %v872, %v874
        %v895 = vsel %vm887, %v886, %v872
        %v896 = vmul.f32 %v894, %v577
        %v897 = vmul.f32 %v893, %v581
        %v898 = vmul.f32 %v892, %v585
        %v899 = vmul.f32 %v891, %v589
        %v900 = vmul.f32 %v890, %v593
        %v901 = vmul.f32 %v889, %v597
        %v902 = vmul.f32 %v888, %v601
        %v903 = vmul.f32 %v895, %v605
        %904 = vrot.lane.b32.xlu0 %v337, 112
        %v905 = vpop.permute.xlu0 %904
        %906 = vrot.lane.b32.xlu0 %v338, 112
        %v907 = vpop.permute.xlu0 %906
        %908 = vrot.lane.b32.xlu0 %v339, 112
        %v909 = vpop.permute.xlu0 %908
        %910 = vrot.lane.b32.xlu0 %v340, 112
        %v911 = vpop.permute.xlu0 %910
        %912 = vrot.lane.b32.xlu0 %v341, 112
        %v913 = vpop.permute.xlu0 %912
        %914 = vrot.lane.b32.xlu0 %v342, 112
        %v915 = vpop.permute.xlu0 %914
        %916 = vrot.lane.b32.xlu0 %v343, 112
        %v917 = vpop.permute.xlu0 %916
        %918 = vrot.lane.b32.xlu0 %v344, 112
        %v919 = vpop.permute.xlu0 %918
        %vm920 = vcmp.lt.s32.totalorder %v721, 112
        %v921 = vsel %vm920, %v917, %v919
        %v922 = vsel %vm920, %v915, %v917
        %v923 = vsel %vm920, %v913, %v915
        %v924 = vsel %vm920, %v911, %v913
        %v925 = vsel %vm920, %v909, %v911
        %v926 = vsel %vm920, %v907, %v909
        %v927 = vsel %vm920, %v905, %v907
        %v928 = vsel %vm920, %v919, %v905
        %v929 = vmul.f32 %v927, %v622
        %v930 = vmul.f32 %v926, %v626
        %v931 = vmul.f32 %v925, %v630
        %v932 = vmul.f32 %v924, %v634
        %v933 = vmul.f32 %v923, %v638
        %v934 = vmul.f32 %v922, %v642
        %v935 = vmul.f32 %v921, %v646
        %v936 = vmul.f32 %v928, %v650
        %937 = vrot.lane.b32.xlu0 %v337, 111
        %v938 = vpop.permute.xlu0 %937
        %939 = vrot.lane.b32.xlu0 %v338, 111
        %v940 = vpop.permute.xlu0 %939
        %941 = vrot.lane.b32.xlu0 %v339, 111
        %v942 = vpop.permute.xlu0 %941
        %943 = vrot.lane.b32.xlu0 %v340, 111
        %v944 = vpop.permute.xlu0 %943
        %945 = vrot.lane.b32.xlu0 %v341, 111
        %v946 = vpop.permute.xlu0 %945
        %947 = vrot.lane.b32.xlu0 %v342, 111
        %v948 = vpop.permute.xlu0 %947
        %949 = vrot.lane.b32.xlu0 %v343, 111
        %v950 = vpop.permute.xlu0 %949
        %951 = vrot.lane.b32.xlu0 %v344, 111
        %v952 = vpop.permute.xlu0 %951
        %vm953 = vcmp.lt.s32.totalorder %v721, 111
        %v954 = vsel %vm953, %v950, %v952
        %v955 = vsel %vm953, %v948, %v950
        %v956 = vsel %vm953, %v946, %v948
        %v957 = vsel %vm953, %v944, %v946
        %v958 = vsel %vm953, %v942, %v944
        %v959 = vsel %vm953, %v940, %v942
        %v960 = vsel %vm953, %v938, %v940
        %v961 = vsel %vm953, %v952, %v938
        %v962 = vmul.f32 %v960, %v667
        %v963 = vmul.f32 %v959, %v671
        %v964 = vmul.f32 %v958, %v675
        %v965 = vmul.f32 %v957, %v679
        %v966 = vmul.f32 %v956, %v683
        %v967 = vmul.f32 %v955, %v687
        %v968 = vmul.f32 %v954, %v691
        %v969 = vmul.f32 %v961, %v695
        %v970 = vld [vmem:[%s2] sm:$0xff]
        %v971 = vld [vmem:[%s3] sm:$0xff]
        %973 = vset.pattern.permute.xlu0 0
        %974 = vperm.xlu0 %973, %v971
        %v975 = vpop.permute.xlu0 %974
        %vm977 = vcmask 588800
        %v979 = vsel %vm977, %v970, 0
        %981 = vmatprep.subr.mxu0 %v732
        %982 = vmatpush1.msra.mxu0 %v731
        %983 = vmatprep.subr.mxu0 %v765
        %984 = vmatpush1.msra.mxu0 %v764
        %985 = vmatprep.subr.mxu0 %v798
        %986 = vmatpush1.msra.mxu0 %v797
        %987 = vmatprep.subr.mxu0 %v831
        %988 = vmatpush1.msra.mxu0 %v830
        %989 = vmatprep.subr.mxu0 %v338
        %990 = vmatpush1.msra.mxu0 %v337
        %991 = vmatprep.subr.mxu0 %v864
        %992 = vmatpush1.msra.mxu0 %v863
        %993 = vmatprep.subr.mxu0 %v897
        %994 = vmatpush1.msra.mxu0 %v896
        %995 = vmatprep.subr.mxu0 %v930
        %996 = vmatpush1.msra.mxu0 %v929
        %997 = vmatprep.subr.mxu0 %v963
        %998 = vmatpush1.msra.mxu0 %v962
        %999 = vmatprep.subr.mxu0 0.0
        %1000 = vmatpush1.msra.mxu0 0.0
        %1001 = vmatprep.subr.mxu0 0.0
        %1002 = vmatpush1.msra.mxu0 0.0
        %1003 = vmatprep.subr.mxu0 0.0
        %1004 = vmatpush1.msra.mxu0 0.0
        %1005 = vmatprep.subr.mxu0 0.0
        %1006 = vmatpush1.msra.mxu0 0.0
        %1007 = vmatprep.subr.mxu0 0.0
        %1008 = vmatpush1.msra.mxu0 0.0
        %1009 = vmatprep.subr.mxu0 0.0
        %1010 = vmatpush1.msra.mxu0 0.0
        %1011 = vmatprep.subr.mxu0 0.0
        %1012 = vmatpush1.msra.mxu0 0.0
        %1013 = vmatprep.subr.mxu0 0.0
        %1014 = vmatpush1.msra.mxu0 0.0
        %1015 = vmatprep.subr.mxu0 0.0
        %1016 = vmatpush1.msra.mxu0 0.0
        %1017 = vmatprep.subr.mxu0 0.0
        %1018 = vmatpush1.msra.mxu0 0.0
        %1019 = vmatprep.subr.mxu0 0.0
        %1020 = vmatpush1.msra.mxu0 0.0
        %1021 = vmatprep.subr.mxu0 0.0
        %1022 = vmatpush1.msra.mxu0 0.0
        %1023 = vmatprep.subr.mxu0 0.0
        %1024 = vmatpush1.msra.mxu0 0.0
        %1025 = vmatprep.subr.mxu0 0.0
        %1026 = vmatpush1.msra.mxu0 0.0
        %1027 = vmatprep.subr.mxu0 0.0
        %1028 = vmatpush1.msra.mxu0 0.0
        %1029 = vmatprep.subr.mxu0 0.0
        %1030 = vmatpush1.msra.mxu0 0.0
        %1031 = vmatprep.subr.mxu0 0.0
        %1032 = vmatpush1.msra.mxu0 0.0
        %1033 = vmatprep.subr.mxu0 0.0
        %1034 = vmatpush1.msra.mxu0 0.0
        %1035 = vmatprep.subr.mxu0 0.0
        %1036 = vmatpush1.msra.mxu0 0.0
        %1037 = vmatprep.subr.mxu0 0.0
        %1038 = vmatpush1.msra.mxu0 0.0
        %1039 = vmatprep.subr.mxu0 0.0
        %1040 = vmatpush1.msra.mxu0 0.0
        %1041 = vmatprep.subr.mxu0 0.0
        %1042 = vmatpush1.msra.mxu0 0.0
        %1043 = vmatprep.subr.mxu0 0.0
        %1044 = vmatpush1.msra.mxu0 0.0
        %1045 = vmatprep.mubr.f32.mxu0 0.0
        %1046 = vmatmul.mubr.f32.gmra.mrb[0].mxu0 %v979
        %v1047 = vpop.f32.mrb[0].mxu0
        %v1048 = vadd.f32 %v975, %v1047
        %v1049 = vpop.f32.mrb[0].mxu0
        %v1050 = vadd.f32 %v975, %v1049
        %1051 = vdwg.mxu0
        %1052 = vmatprep.subr.mxu0 %v734
        %1053 = vmatpush1.msra.mxu0 %v733
        %1054 = vmatprep.subr.mxu0 %v767
        %1055 = vmatpush1.msra.mxu0 %v766
        %1056 = vmatprep.subr.mxu0 %v800
        %1057 = vmatpush1.msra.mxu0 %v799
        %1058 = vmatprep.subr.mxu0 %v833
        %1059 = vmatpush1.msra.mxu0 %v832
        %1060 = vmatprep.subr.mxu0 %v340
        %1061 = vmatpush1.msra.mxu0 %v339
        %1062 = vmatprep.subr.mxu0 %v866
        %1063 = vmatpush1.msra.mxu0 %v865
        %1064 = vmatprep.subr.mxu0 %v899
        %1065 = vmatpush1.msra.mxu0 %v898
        %1066 = vmatprep.subr.mxu0 %v932
        %1067 = vmatpush1.msra.mxu0 %v931
        %1068 = vmatprep.subr.mxu0 %v965
        %1069 = vmatpush1.msra.mxu0 %v964
        %1070 = vmatprep.subr.mxu0 0.0
        %1071 = vmatpush1.msra.mxu0 0.0
        %1072 = vmatprep.subr.mxu0 0.0
        %1073 = vmatpush1.msra.mxu0 0.0
        %1074 = vmatprep.subr.mxu0 0.0
        %1075 = vmatpush1.msra.mxu0 0.0
        %1076 = vmatprep.subr.mxu0 0.0
        %1077 = vmatpush1.msra.mxu0 0.0
        %1078 = vmatprep.subr.mxu0 0.0
        %1079 = vmatpush1.msra.mxu0 0.0
        %1080 = vmatprep.subr.mxu0 0.0
        %1081 = vmatpush1.msra.mxu0 0.0
        %1082 = vmatprep.subr.mxu0 0.0
        %1083 = vmatpush1.msra.mxu0 0.0
        %1084 = vmatprep.subr.mxu0 0.0
        %1085 = vmatpush1.msra.mxu0 0.0
        %1086 = vmatprep.subr.mxu0 0.0
        %1087 = vmatpush1.msra.mxu0 0.0
        %1088 = vmatprep.subr.mxu0 0.0
        %1089 = vmatpush1.msra.mxu0 0.0
        %1090 = vmatprep.subr.mxu0 0.0
        %1091 = vmatpush1.msra.mxu0 0.0
        %1092 = vmatprep.subr.mxu0 0.0
        %1093 = vmatpush1.msra.mxu0 0.0
        %1094 = vmatprep.subr.mxu0 0.0
        %1095 = vmatpush1.msra.mxu0 0.0
        %1096 = vmatprep.subr.mxu0 0.0
        %1097 = vmatpush1.msra.mxu0 0.0
        %1098 = vmatprep.subr.mxu0 0.0
        %1099 = vmatpush1.msra.mxu0 0.0
        %1100 = vmatprep.subr.mxu0 0.0
        %1101 = vmatpush1.msra.mxu0 0.0
        %1102 = vmatprep.subr.mxu0 0.0
        %1103 = vmatpush1.msra.mxu0 0.0
        %1104 = vmatprep.subr.mxu0 0.0
        %1105 = vmatpush1.msra.mxu0 0.0
        %1106 = vmatprep.subr.mxu0 0.0
        %1107 = vmatpush1.msra.mxu0 0.0
        %1108 = vmatprep.subr.mxu0 0.0
        %1109 = vmatpush1.msra.mxu0 0.0
        %1110 = vmatprep.subr.mxu0 0.0
        %1111 = vmatpush1.msra.mxu0 0.0
        %1112 = vmatprep.subr.mxu0 0.0
        %1113 = vmatpush1.msra.mxu0 0.0
        %1114 = vmatprep.subr.mxu0 0.0
        %1115 = vmatpush1.msra.mxu0 0.0
        %1116 = vmatprep.mubr.f32.mxu0 0.0
        %1117 = vmatmul.mubr.f32.gmra.mrb[0].mxu0 %v979
        %v1118 = vpop.f32.mrb[0].mxu0
        %v1119 = vadd.f32 %v975, %v1118
        %v1120 = vpop.f32.mrb[0].mxu0
        %v1121 = vadd.f32 %v975, %v1120
        %1122 = vdwg.mxu0
        %1123 = vmatprep.subr.mxu0 %v736
        %1124 = vmatpush1.msra.mxu0 %v735
        %1125 = vmatprep.subr.mxu0 %v769
        %1126 = vmatpush1.msra.mxu0 %v768
        %1127 = vmatprep.subr.mxu0 %v802
        %1128 = vmatpush1.msra.mxu0 %v801
        %1129 = vmatprep.subr.mxu0 %v835
        %1130 = vmatpush1.msra.mxu0 %v834
        %1131 = vmatprep.subr.mxu0 %v342
        %1132 = vmatpush1.msra.mxu0 %v341
        %1133 = vmatprep.subr.mxu0 %v868
        %1134 = vmatpush1.msra.mxu0 %v867
        %1135 = vmatprep.subr.mxu0 %v901
        %1136 = vmatpush1.msra.mxu0 %v900
        %1137 = vmatprep.subr.mxu0 %v934
        %1138 = vmatpush1.msra.mxu0 %v933
        %1139 = vmatprep.subr.mxu0 %v967
        %1140 = vmatpush1.msra.mxu0 %v966
        %1141 = vmatprep.subr.mxu0 0.0
        %1142 = vmatpush1.msra.mxu0 0.0
        %1143 = vmatprep.subr.mxu0 0.0
        %1144 = vmatpush1.msra.mxu0 0.0
        %1145 = vmatprep.subr.mxu0 0.0
        %1146 = vmatpush1.msra.mxu0 0.0
        %1147 = vmatprep.subr.mxu0 0.0
        %1148 = vmatpush1.msra.mxu0 0.0
        %1149 = vmatprep.subr.mxu0 0.0
        %1150 = vmatpush1.msra.mxu0 0.0
        %1151 = vmatprep.subr.mxu0 0.0
        %1152 = vmatpush1.msra.mxu0 0.0
        %1153 = vmatprep.subr.mxu0 0.0
        %1154 = vmatpush1.msra.mxu0 0.0
        %1155 = vmatprep.subr.mxu0 0.0
        %1156 = vmatpush1.msra.mxu0 0.0
        %1157 = vmatprep.subr.mxu0 0.0
        %1158 = vmatpush1.msra.mxu0 0.0
        %1159 = vmatprep.subr.mxu0 0.0
        %1160 = vmatpush1.msra.mxu0 0.0
        %1161 = vmatprep.subr.mxu0 0.0
        %1162 = vmatpush1.msra.mxu0 0.0
        %1163 = vmatprep.subr.mxu0 0.0
        %1164 = vmatpush1.msra.mxu0 0.0
        %1165 = vmatprep.subr.mxu0 0.0
        %1166 = vmatpush1.msra.mxu0 0.0
        %1167 = vmatprep.subr.mxu0 0.0
        %1168 = vmatpush1.msra.mxu0 0.0
        %1169 = vmatprep.subr.mxu0 0.0
        %1170 = vmatpush1.msra.mxu0 0.0
        %1171 = vmatprep.subr.mxu0 0.0
        %1172 = vmatpush1.msra.mxu0 0.0
        %1173 = vmatprep.subr.mxu0 0.0
        %1174 = vmatpush1.msra.mxu0 0.0
        %1175 = vmatprep.subr.mxu0 0.0
        %1176 = vmatpush1.msra.mxu0 0.0
        %1177 = vmatprep.subr.mxu0 0.0
        %1178 = vmatpush1.msra.mxu0 0.0
        %1179 = vmatprep.subr.mxu0 0.0
        %1180 = vmatpush1.msra.mxu0 0.0
        %1181 = vmatprep.subr.mxu0 0.0
        %1182 = vmatpush1.msra.mxu0 0.0
        %1183 = vmatprep.subr.mxu0 0.0
        %1184 = vmatpush1.msra.mxu0 0.0
        %1185 = vmatprep.subr.mxu0 0.0
        %1186 = vmatpush1.msra.mxu0 0.0
        %1187 = vmatprep.mubr.f32.mxu0 0.0
        %1188 = vmatmul.mubr.f32.gmra.mrb[0].mxu0 %v979
        %v1189 = vpop.f32.mrb[0].mxu0
        %v1190 = vadd.f32 %v975, %v1189
        %v1191 = vpop.f32.mrb[0].mxu0
        %v1192 = vadd.f32 %v975, %v1191
        %1193 = vdwg.mxu0
        %1194 = vmatprep.subr.mxu0 %v738
        %1195 = vmatpush1.msra.mxu0 %v737
        %1196 = vmatprep.subr.mxu0 %v771
        %1197 = vmatpush1.msra.mxu0 %v770
        %1198 = vmatprep.subr.mxu0 %v804
        %1199 = vmatpush1.msra.mxu0 %v803
        %1200 = vmatprep.subr.mxu0 %v837
        %1201 = vmatpush1.msra.mxu0 %v836
        %1202 = vmatprep.subr.mxu0 %v344
        %1203 = vmatpush1.msra.mxu0 %v343
        %1204 = vmatprep.subr.mxu0 %v870
        %1205 = vmatpush1.msra.mxu0 %v869
        %1206 = vmatprep.subr.mxu0 %v903
        %1207 = vmatpush1.msra.mxu0 %v902
        %1208 = vmatprep.subr.mxu0 %v936
        %1209 = vmatpush1.msra.mxu0 %v935
        %1210 = vmatprep.subr.mxu0 %v969
        %1211 = vmatpush1.msra.mxu0 %v968
        %1212 = vmatprep.subr.mxu0 0.0
        %1213 = vmatpush1.msra.mxu0 0.0
        %1214 = vmatprep.subr.mxu0 0.0
        %1215 = vmatpush1.msra.mxu0 0.0
        %1216 = vmatprep.subr.mxu0 0.0
        %1217 = vmatpush1.msra.mxu0 0.0
        %1218 = vmatprep.subr.mxu0 0.0
        %1219 = vmatpush1.msra.mxu0 0.0
        %1220 = vmatprep.subr.mxu0 0.0
        %1221 = vmatpush1.msra.mxu0 0.0
        %1222 = vmatprep.subr.mxu0 0.0
        %1223 = vmatpush1.msra.mxu0 0.0
        %1224 = vmatprep.subr.mxu0 0.0
        %1225 = vmatpush1.msra.mxu0 0.0
        %1226 = vmatprep.subr.mxu0 0.0
        %1227 = vmatpush1.msra.mxu0 0.0
        %1228 = vmatprep.subr.mxu0 0.0
        %1229 = vmatpush1.msra.mxu0 0.0
        %1230 = vmatprep.subr.mxu0 0.0
        %1231 = vmatpush1.msra.mxu0 0.0
        %1232 = vmatprep.subr.mxu0 0.0
        %1233 = vmatpush1.msra.mxu0 0.0
        %1234 = vmatprep.subr.mxu0 0.0
        %1235 = vmatpush1.msra.mxu0 0.0
        %1236 = vmatprep.subr.mxu0 0.0
        %1237 = vmatpush1.msra.mxu0 0.0
        %1238 = vmatprep.subr.mxu0 0.0
        %1239 = vmatpush1.msra.mxu0 0.0
        %1240 = vmatprep.subr.mxu0 0.0
        %1241 = vmatpush1.msra.mxu0 0.0
        %1242 = vmatprep.subr.mxu0 0.0
        %1243 = vmatpush1.msra.mxu0 0.0
        %1244 = vmatprep.subr.mxu0 0.0
        %1245 = vmatpush1.msra.mxu0 0.0
        %1246 = vmatprep.subr.mxu0 0.0
        %1247 = vmatpush1.msra.mxu0 0.0
        %1248 = vmatprep.subr.mxu0 0.0
        %1249 = vmatpush1.msra.mxu0 0.0
        %1250 = vmatprep.subr.mxu0 0.0
        %1251 = vmatpush1.msra.mxu0 0.0
        %1252 = vmatprep.subr.mxu0 0.0
        %1253 = vmatpush1.msra.mxu0 0.0
        %1254 = vmatprep.subr.mxu0 0.0
        %1255 = vmatpush1.msra.mxu0 0.0
        %1256 = vmatprep.subr.mxu0 0.0
        %1257 = vmatpush1.msra.mxu0 0.0
        %1258 = vmatprep.mubr.f32.mxu0 0.0
        %1259 = vmatmul.mubr.f32.gmra.mrb[0].mxu0 %v979
        %v1260 = vpop.f32.mrb[0].mxu0
        %v1261 = vadd.f32 %v975, %v1260
        %v1262 = vpop.f32.mrb[0].mxu0
        %v1263 = vadd.f32 %v975, %v1262
        %1264 = vdwg.mxu0
        %v1265 = vmax.f32 %v1048, 0.0
        %v1266 = vmax.f32 %v1050, 0.0
        %v1267 = vmax.f32 %v1119, 0.0
        %v1268 = vmax.f32 %v1121, 0.0
        %v1269 = vmax.f32 %v1190, 0.0
        %v1270 = vmax.f32 %v1192, 0.0
        %v1271 = vmax.f32 %v1261, 0.0
        %v1272 = vmax.f32 %v1263, 0.0
        %1273 = vrot.lane.b32.xlu0 %v1265, 17
        %v1274 = vpop.permute.xlu0 %1273
        %1275 = vrot.lane.b32.xlu0 %v1266, 17
        %v1276 = vpop.permute.xlu0 %1275
        %1277 = vrot.lane.b32.xlu0 %v1267, 17
        %v1278 = vpop.permute.xlu0 %1277
        %1279 = vrot.lane.b32.xlu0 %v1268, 17
        %v1280 = vpop.permute.xlu0 %1279
        %1281 = vrot.lane.b32.xlu0 %v1269, 17
        %v1282 = vpop.permute.xlu0 %1281
        %1283 = vrot.lane.b32.xlu0 %v1270, 17
        %v1284 = vpop.permute.xlu0 %1283
        %1285 = vrot.lane.b32.xlu0 %v1271, 17
        %v1286 = vpop.permute.xlu0 %1285
        %1287 = vrot.lane.b32.xlu0 %v1272, 17
        %v1288 = vpop.permute.xlu0 %1287
        %v1289 = vsel %vm722, %v1286, %v1288
        %v1290 = vsel %vm722, %v1284, %v1286
        %v1291 = vsel %vm722, %v1282, %v1284
        %v1292 = vsel %vm722, %v1280, %v1282
        %v1293 = vsel %vm722, %v1278, %v1280
        %v1294 = vsel %vm722, %v1276, %v1278
        %v1295 = vsel %vm722, %v1274, %v1276
        %v1296 = vsel %vm722, %v1288, %v1274
        %v1297 = vmul.f32 %v1296, %v352
        %v1298 = vmul.f32 %v1295, %v356
        %v1299 = vmul.f32 %v1294, %v360
        %v1300 = vmul.f32 %v1293, %v364
        %v1301 = vmul.f32 %v1292, %v368
        %v1302 = vmul.f32 %v1291, %v372
        %v1303 = vmul.f32 %v1290, %v376
        %v1304 = vmul.f32 %v1289, %v380
        %1305 = vrot.lane.b32.xlu0 %v1265, 16
        %v1306 = vpop.permute.xlu0 %1305
        %1307 = vrot.lane.b32.xlu0 %v1266, 16
        %v1308 = vpop.permute.xlu0 %1307
        %1309 = vrot.lane.b32.xlu0 %v1267, 16
        %v1310 = vpop.permute.xlu0 %1309
        %1311 = vrot.lane.b32.xlu0 %v1268, 16
        %v1312 = vpop.permute.xlu0 %1311
        %1313 = vrot.lane.b32.xlu0 %v1269, 16
        %v1314 = vpop.permute.xlu0 %1313
        %1315 = vrot.lane.b32.xlu0 %v1270, 16
        %v1316 = vpop.permute.xlu0 %1315
        %1317 = vrot.lane.b32.xlu0 %v1271, 16
        %v1318 = vpop.permute.xlu0 %1317
        %1319 = vrot.lane.b32.xlu0 %v1272, 16
        %v1320 = vpop.permute.xlu0 %1319
        %v1321 = vsel %vm755, %v1318, %v1320
        %v1322 = vsel %vm755, %v1316, %v1318
        %v1323 = vsel %vm755, %v1314, %v1316
        %v1324 = vsel %vm755, %v1312, %v1314
        %v1325 = vsel %vm755, %v1310, %v1312
        %v1326 = vsel %vm755, %v1308, %v1310
        %v1327 = vsel %vm755, %v1306, %v1308
        %v1328 = vsel %vm755, %v1320, %v1306
        %v1329 = vmul.f32 %v1328, %v397
        %v1330 = vmul.f32 %v1327, %v401
        %v1331 = vmul.f32 %v1326, %v405
        %v1332 = vmul.f32 %v1325, %v409
        %v1333 = vmul.f32 %v1324, %v413
        %v1334 = vmul.f32 %v1323, %v417
        %v1335 = vmul.f32 %v1322, %v421
        %v1336 = vmul.f32 %v1321, %v425
        %1337 = vrot.lane.b32.xlu0 %v1265, 15
        %v1338 = vpop.permute.xlu0 %1337
        %1339 = vrot.lane.b32.xlu0 %v1266, 15
        %v1340 = vpop.permute.xlu0 %1339
        %1341 = vrot.lane.b32.xlu0 %v1267, 15
        %v1342 = vpop.permute.xlu0 %1341
        %1343 = vrot.lane.b32.xlu0 %v1268, 15
        %v1344 = vpop.permute.xlu0 %1343
        %1345 = vrot.lane.b32.xlu0 %v1269, 15
        %v1346 = vpop.permute.xlu0 %1345
        %1347 = vrot.lane.b32.xlu0 %v1270, 15
        %v1348 = vpop.permute.xlu0 %1347
        %1349 = vrot.lane.b32.xlu0 %v1271, 15
        %v1350 = vpop.permute.xlu0 %1349
        %1351 = vrot.lane.b32.xlu0 %v1272, 15
        %v1352 = vpop.permute.xlu0 %1351
        %v1353 = vsel %vm788, %v1350, %v1352
        %v1354 = vsel %vm788, %v1348, %v1350
        %v1355 = vsel %vm788, %v1346, %v1348
        %v1356 = vsel %vm788, %v1344, %v1346
        %v1357 = vsel %vm788, %v1342, %v1344
        %v1358 = vsel %vm788, %v1340, %v1342
        %v1359 = vsel %vm788, %v1338, %v1340
        %v1360 = vsel %vm788, %v1352, %v1338
        %v1361 = vmul.f32 %v1360, %v442
        %v1362 = vmul.f32 %v1359, %v446
        %v1363 = vmul.f32 %v1358, %v450
        %v1364 = vmul.f32 %v1357, %v454
        %v1365 = vmul.f32 %v1356, %v458
        %v1366 = vmul.f32 %v1355, %v462
        %v1367 = vmul.f32 %v1354, %v466
        %v1368 = vmul.f32 %v1353, %v470
        %1369 = vrot.lane.b32.xlu0 %v1265, 1
        %v1370 = vpop.permute.xlu0 %1369
        %1371 = vrot.lane.b32.xlu0 %v1266, 1
        %v1372 = vpop.permute.xlu0 %1371
        %1373 = vrot.lane.b32.xlu0 %v1267, 1
        %v1374 = vpop.permute.xlu0 %1373
        %1375 = vrot.lane.b32.xlu0 %v1268, 1
        %v1376 = vpop.permute.xlu0 %1375
        %1377 = vrot.lane.b32.xlu0 %v1269, 1
        %v1378 = vpop.permute.xlu0 %1377
        %1379 = vrot.lane.b32.xlu0 %v1270, 1
        %v1380 = vpop.permute.xlu0 %1379
        %1381 = vrot.lane.b32.xlu0 %v1271, 1
        %v1382 = vpop.permute.xlu0 %1381
        %1383 = vrot.lane.b32.xlu0 %v1272, 1
        %v1384 = vpop.permute.xlu0 %1383
        %v1385 = vsel %vm821, %v1382, %v1384
        %v1386 = vsel %vm821, %v1380, %v1382
        %v1387 = vsel %vm821, %v1378, %v1380
        %v1388 = vsel %vm821, %v1376, %v1378
        %v1389 = vsel %vm821, %v1374, %v1376
        %v1390 = vsel %vm821, %v1372, %v1374
        %v1391 = vsel %vm821, %v1370, %v1372
        %v1392 = vsel %vm821, %v1384, %v1370
        %v1393 = vmul.f32 %v1392, %v487
        %v1394 = vmul.f32 %v1391, %v491
        %v1395 = vmul.f32 %v1390, %v495
        %v1396 = vmul.f32 %v1389, %v499
        %v1397 = vmul.f32 %v1388, %v503
        %v1398 = vmul.f32 %v1387, %v507
        %v1399 = vmul.f32 %v1386, %v511
        %v1400 = vmul.f32 %v1385, %v515
        %1401 = vrot.lane.b32.xlu0 %v1265, 127
        %v1402 = vpop.permute.xlu0 %1401
        %1403 = vrot.lane.b32.xlu0 %v1266, 127
        %v1404 = vpop.permute.xlu0 %1403
        %1405 = vrot.lane.b32.xlu0 %v1267, 127
        %v1406 = vpop.permute.xlu0 %1405
        %1407 = vrot.lane.b32.xlu0 %v1268, 127
        %v1408 = vpop.permute.xlu0 %1407
        %1409 = vrot.lane.b32.xlu0 %v1269, 127
        %v1410 = vpop.permute.xlu0 %1409
        %1411 = vrot.lane.b32.xlu0 %v1270, 127
        %v1412 = vpop.permute.xlu0 %1411
        %1413 = vrot.lane.b32.xlu0 %v1271, 127
        %v1414 = vpop.permute.xlu0 %1413
        %1415 = vrot.lane.b32.xlu0 %v1272, 127
        %v1416 = vpop.permute.xlu0 %1415
        %v1417 = vsel %vm854, %v1414, %v1416
        %v1418 = vsel %vm854, %v1412, %v1414
        %v1419 = vsel %vm854, %v1410, %v1412
        %v1420 = vsel %vm854, %v1408, %v1410
        %v1421 = vsel %vm854, %v1406, %v1408
        %v1422 = vsel %vm854, %v1404, %v1406
        %v1423 = vsel %vm854, %v1402, %v1404
        %v1424 = vsel %vm854, %v1416, %v1402
        %v1425 = vmul.f32 %v1423, %v532
        %v1426 = vmul.f32 %v1422, %v536
        %v1427 = vmul.f32 %v1421, %v540
        %v1428 = vmul.f32 %v1420, %v544
        %v1429 = vmul.f32 %v1419, %v548
        %v1430 = vmul.f32 %v1418, %v552
        %v1431 = vmul.f32 %v1417, %v556
        %v1432 = vmul.f32 %v1424, %v560
        %1433 = vrot.lane.b32.xlu0 %v1265, 113
        %v1434 = vpop.permute.xlu0 %1433
        %1435 = vrot.lane.b32.xlu0 %v1266, 113
        %v1436 = vpop.permute.xlu0 %1435
        %1437 = vrot.lane.b32.xlu0 %v1267, 113
        %v1438 = vpop.permute.xlu0 %1437
        %1439 = vrot.lane.b32.xlu0 %v1268, 113
        %v1440 = vpop.permute.xlu0 %1439
        %1441 = vrot.lane.b32.xlu0 %v1269, 113
        %v1442 = vpop.permute.xlu0 %1441
        %1443 = vrot.lane.b32.xlu0 %v1270, 113
        %v1444 = vpop.permute.xlu0 %1443
        %1445 = vrot.lane.b32.xlu0 %v1271, 113
        %v1446 = vpop.permute.xlu0 %1445
        %1447 = vrot.lane.b32.xlu0 %v1272, 113
        %v1448 = vpop.permute.xlu0 %1447
        %v1449 = vsel %vm887, %v1446, %v1448
        %v1450 = vsel %vm887, %v1444, %v1446
        %v1451 = vsel %vm887, %v1442, %v1444
        %v1452 = vsel %vm887, %v1440, %v1442
        %v1453 = vsel %vm887, %v1438, %v1440
        %v1454 = vsel %vm887, %v1436, %v1438
        %v1455 = vsel %vm887, %v1434, %v1436
        %v1456 = vsel %vm887, %v1448, %v1434
        %v1457 = vmul.f32 %v1455, %v577
        %v1458 = vmul.f32 %v1454, %v581
        %v1459 = vmul.f32 %v1453, %v585
        %v1460 = vmul.f32 %v1452, %v589
        %v1461 = vmul.f32 %v1451, %v593
        %v1462 = vmul.f32 %v1450, %v597
        %v1463 = vmul.f32 %v1449, %v601
        %v1464 = vmul.f32 %v1456, %v605
        %1465 = vrot.lane.b32.xlu0 %v1265, 112
        %v1466 = vpop.permute.xlu0 %1465
        %1467 = vrot.lane.b32.xlu0 %v1266, 112
        %v1468 = vpop.permute.xlu0 %1467
        %1469 = vrot.lane.b32.xlu0 %v1267, 112
        %v1470 = vpop.permute.xlu0 %1469
        %1471 = vrot.lane.b32.xlu0 %v1268, 112
        %v1472 = vpop.permute.xlu0 %1471
        %1473 = vrot.lane.b32.xlu0 %v1269, 112
        %v1474 = vpop.permute.xlu0 %1473
        %1475 = vrot.lane.b32.xlu0 %v1270, 112
        %v1476 = vpop.permute.xlu0 %1475
        %1477 = vrot.lane.b32.xlu0 %v1271, 112
        %v1478 = vpop.permute.xlu0 %1477
        %1479 = vrot.lane.b32.xlu0 %v1272, 112
        %v1480 = vpop.permute.xlu0 %1479
        %v1481 = vsel %vm920, %v1478, %v1480
        %v1482 = vsel %vm920, %v1476, %v1478
        %v1483 = vsel %vm920, %v1474, %v1476
        %v1484 = vsel %vm920, %v1472, %v1474
        %v1485 = vsel %vm920, %v1470, %v1472
        %v1486 = vsel %vm920, %v1468, %v1470
        %v1487 = vsel %vm920, %v1466, %v1468
        %v1488 = vsel %vm920, %v1480, %v1466
        %v1489 = vmul.f32 %v1487, %v622
        %v1490 = vmul.f32 %v1486, %v626
        %v1491 = vmul.f32 %v1485, %v630
        %v1492 = vmul.f32 %v1484, %v634
        %v1493 = vmul.f32 %v1483, %v638
        %v1494 = vmul.f32 %v1482, %v642
        %v1495 = vmul.f32 %v1481, %v646
        %v1496 = vmul.f32 %v1488, %v650
        %1497 = vrot.lane.b32.xlu0 %v1265, 111
        %v1498 = vpop.permute.xlu0 %1497
        %1499 = vrot.lane.b32.xlu0 %v1266, 111
        %v1500 = vpop.permute.xlu0 %1499
        %1501 = vrot.lane.b32.xlu0 %v1267, 111
        %v1502 = vpop.permute.xlu0 %1501
        %1503 = vrot.lane.b32.xlu0 %v1268, 111
        %v1504 = vpop.permute.xlu0 %1503
        %1505 = vrot.lane.b32.xlu0 %v1269, 111
        %v1506 = vpop.permute.xlu0 %1505
        %1507 = vrot.lane.b32.xlu0 %v1270, 111
        %v1508 = vpop.permute.xlu0 %1507
        %1509 = vrot.lane.b32.xlu0 %v1271, 111
        %v1510 = vpop.permute.xlu0 %1509
        %1511 = vrot.lane.b32.xlu0 %v1272, 111
        %v1512 = vpop.permute.xlu0 %1511
        %v1513 = vsel %vm953, %v1510, %v1512
        %v1514 = vsel %vm953, %v1508, %v1510
        %v1515 = vsel %vm953, %v1506, %v1508
        %v1516 = vsel %vm953, %v1504, %v1506
        %v1517 = vsel %vm953, %v1502, %v1504
        %v1518 = vsel %vm953, %v1500, %v1502
        %v1519 = vsel %vm953, %v1498, %v1500
        %v1520 = vsel %vm953, %v1512, %v1498
        %v1521 = vmul.f32 %v1519, %v667
        %v1522 = vmul.f32 %v1518, %v671
        %v1523 = vmul.f32 %v1517, %v675
        %v1524 = vmul.f32 %v1516, %v679
        %v1525 = vmul.f32 %v1515, %v683
        %v1526 = vmul.f32 %v1514, %v687
        %v1527 = vmul.f32 %v1513, %v691
        %v1528 = vmul.f32 %v1520, %v695
        %v1529 = vld [vmem:[%s4] sm:$0xff]
        %v1530 = vld [vmem:[%s5] sm:$0xff]
        %1532 = vset.pattern.permute.xlu0 0
        %1533 = vperm.xlu0 %1532, %v1530
        %v1534 = vpop.permute.xlu0 %1533
        %v1537 = vsel %vm977, %v1529, 0
        %1539 = vmatprep.subr.mxu0 %v1298
        %1540 = vmatpush1.msra.mxu0 %v1297
        %1541 = vmatprep.subr.mxu0 %v1330
        %1542 = vmatpush1.msra.mxu0 %v1329
        %1543 = vmatprep.subr.mxu0 %v1362
        %1544 = vmatpush1.msra.mxu0 %v1361
        %1545 = vmatprep.subr.mxu0 %v1394
        %1546 = vmatpush1.msra.mxu0 %v1393
        %1547 = vmatprep.subr.mxu0 %v1266
        %1548 = vmatpush1.msra.mxu0 %v1265
        %1549 = vmatprep.subr.mxu0 %v1426
        %1550 = vmatpush1.msra.mxu0 %v1425
        %1551 = vmatprep.subr.mxu0 %v1458
        %1552 = vmatpush1.msra.mxu0 %v1457
        %1553 = vmatprep.subr.mxu0 %v1490
        %1554 = vmatpush1.msra.mxu0 %v1489
        %1555 = vmatprep.subr.mxu0 %v1522
        %1556 = vmatpush1.msra.mxu0 %v1521
        %1557 = vmatprep.subr.mxu0 0.0
        %1558 = vmatpush1.msra.mxu0 0.0
        %1559 = vmatprep.subr.mxu0 0.0
        %1560 = vmatpush1.msra.mxu0 0.0
        %1561 = vmatprep.subr.mxu0 0.0
        %1562 = vmatpush1.msra.mxu0 0.0
        %1563 = vmatprep.subr.mxu0 0.0
        %1564 = vmatpush1.msra.mxu0 0.0
        %1565 = vmatprep.subr.mxu0 0.0
        %1566 = vmatpush1.msra.mxu0 0.0
        %1567 = vmatprep.subr.mxu0 0.0
        %1568 = vmatpush1.msra.mxu0 0.0
        %1569 = vmatprep.subr.mxu0 0.0
        %1570 = vmatpush1.msra.mxu0 0.0
        %1571 = vmatprep.subr.mxu0 0.0
        %1572 = vmatpush1.msra.mxu0 0.0
        %1573 = vmatprep.subr.mxu0 0.0
        %1574 = vmatpush1.msra.mxu0 0.0
        %1575 = vmatprep.subr.mxu0 0.0
        %1576 = vmatpush1.msra.mxu0 0.0
        %1577 = vmatprep.subr.mxu0 0.0
        %1578 = vmatpush1.msra.mxu0 0.0
        %1579 = vmatprep.subr.mxu0 0.0
        %1580 = vmatpush1.msra.mxu0 0.0
        %1581 = vmatprep.subr.mxu0 0.0
        %1582 = vmatpush1.msra.mxu0 0.0
        %1583 = vmatprep.subr.mxu0 0.0
        %1584 = vmatpush1.msra.mxu0 0.0
        %1585 = vmatprep.subr.mxu0 0.0
        %1586 = vmatpush1.msra.mxu0 0.0
        %1587 = vmatprep.subr.mxu0 0.0
        %1588 = vmatpush1.msra.mxu0 0.0
        %1589 = vmatprep.subr.mxu0 0.0
        %1590 = vmatpush1.msra.mxu0 0.0
        %1591 = vmatprep.subr.mxu0 0.0
        %1592 = vmatpush1.msra.mxu0 0.0
        %1593 = vmatprep.subr.mxu0 0.0
        %1594 = vmatpush1.msra.mxu0 0.0
        %1595 = vmatprep.subr.mxu0 0.0
        %1596 = vmatpush1.msra.mxu0 0.0
        %1597 = vmatprep.subr.mxu0 0.0
        %1598 = vmatpush1.msra.mxu0 0.0
        %1599 = vmatprep.subr.mxu0 0.0
        %1600 = vmatpush1.msra.mxu0 0.0
        %1601 = vmatprep.subr.mxu0 0.0
        %1602 = vmatpush1.msra.mxu0 0.0
        %1603 = vmatprep.mubr.f32.mxu0 0.0
        %1604 = vmatmul.mubr.f32.gmra.mrb[0].mxu0 %v1537
        %v1605 = vpop.f32.mrb[0].mxu0
        %v1606 = vadd.f32 %v1534, %v1605
        %v1607 = vpop.f32.mrb[0].mxu0
        %v1608 = vadd.f32 %v1534, %v1607
        %1609 = vdwg.mxu0
        %1610 = vmatprep.subr.mxu0 %v1300
        %1611 = vmatpush1.msra.mxu0 %v1299
        %1612 = vmatprep.subr.mxu0 %v1332
        %1613 = vmatpush1.msra.mxu0 %v1331
        %1614 = vmatprep.subr.mxu0 %v1364
        %1615 = vmatpush1.msra.mxu0 %v1363
        %1616 = vmatprep.subr.mxu0 %v1396
        %1617 = vmatpush1.msra.mxu0 %v1395
        %1618 = vmatprep.subr.mxu0 %v1268
        %1619 = vmatpush1.msra.mxu0 %v1267
        %1620 = vmatprep.subr.mxu0 %v1428
        %1621 = vmatpush1.msra.mxu0 %v1427
        %1622 = vmatprep.subr.mxu0 %v1460
        %1623 = vmatpush1.msra.mxu0 %v1459
        %1624 = vmatprep.subr.mxu0 %v1492
        %1625 = vmatpush1.msra.mxu0 %v1491
        %1626 = vmatprep.subr.mxu0 %v1524
        %1627 = vmatpush1.msra.mxu0 %v1523
        %1628 = vmatprep.subr.mxu0 0.0
        %1629 = vmatpush1.msra.mxu0 0.0
        %1630 = vmatprep.subr.mxu0 0.0
        %1631 = vmatpush1.msra.mxu0 0.0
        %1632 = vmatprep.subr.mxu0 0.0
        %1633 = vmatpush1.msra.mxu0 0.0
        %1634 = vmatprep.subr.mxu0 0.0
        %1635 = vmatpush1.msra.mxu0 0.0
        %1636 = vmatprep.subr.mxu0 0.0
        %1637 = vmatpush1.msra.mxu0 0.0
        %1638 = vmatprep.subr.mxu0 0.0
        %1639 = vmatpush1.msra.mxu0 0.0
        %1640 = vmatprep.subr.mxu0 0.0
        %1641 = vmatpush1.msra.mxu0 0.0
        %1642 = vmatprep.subr.mxu0 0.0
        %1643 = vmatpush1.msra.mxu0 0.0
        %1644 = vmatprep.subr.mxu0 0.0
        %1645 = vmatpush1.msra.mxu0 0.0
        %1646 = vmatprep.subr.mxu0 0.0
        %1647 = vmatpush1.msra.mxu0 0.0
        %1648 = vmatprep.subr.mxu0 0.0
        %1649 = vmatpush1.msra.mxu0 0.0
        %1650 = vmatprep.subr.mxu0 0.0
        %1651 = vmatpush1.msra.mxu0 0.0
        %1652 = vmatprep.subr.mxu0 0.0
        %1653 = vmatpush1.msra.mxu0 0.0
        %1654 = vmatprep.subr.mxu0 0.0
        %1655 = vmatpush1.msra.mxu0 0.0
        %1656 = vmatprep.subr.mxu0 0.0
        %1657 = vmatpush1.msra.mxu0 0.0
        %1658 = vmatprep.subr.mxu0 0.0
        %1659 = vmatpush1.msra.mxu0 0.0
        %1660 = vmatprep.subr.mxu0 0.0
        %1661 = vmatpush1.msra.mxu0 0.0
        %1662 = vmatprep.subr.mxu0 0.0
        %1663 = vmatpush1.msra.mxu0 0.0
        %1664 = vmatprep.subr.mxu0 0.0
        %1665 = vmatpush1.msra.mxu0 0.0
        %1666 = vmatprep.subr.mxu0 0.0
        %1667 = vmatpush1.msra.mxu0 0.0
        %1668 = vmatprep.subr.mxu0 0.0
        %1669 = vmatpush1.msra.mxu0 0.0
        %1670 = vmatprep.subr.mxu0 0.0
        %1671 = vmatpush1.msra.mxu0 0.0
        %1672 = vmatprep.subr.mxu0 0.0
        %1673 = vmatpush1.msra.mxu0 0.0
        %1674 = vmatprep.mubr.f32.mxu0 0.0
        %1675 = vmatmul.mubr.f32.gmra.mrb[0].mxu0 %v1537
        %v1676 = vpop.f32.mrb[0].mxu0
        %v1677 = vadd.f32 %v1534, %v1676
        %v1678 = vpop.f32.mrb[0].mxu0
        %v1679 = vadd.f32 %v1534, %v1678
        %1680 = vdwg.mxu0
        %1681 = vmatprep.subr.mxu0 %v1302
        %1682 = vmatpush1.msra.mxu0 %v1301
        %1683 = vmatprep.subr.mxu0 %v1334
        %1684 = vmatpush1.msra.mxu0 %v1333
        %1685 = vmatprep.subr.mxu0 %v1366
        %1686 = vmatpush1.msra.mxu0 %v1365
        %1687 = vmatprep.subr.mxu0 %v1398
        %1688 = vmatpush1.msra.mxu0 %v1397
        %1689 = vmatprep.subr.mxu0 %v1270
        %1690 = vmatpush1.msra.mxu0 %v1269
        %1691 = vmatprep.subr.mxu0 %v1430
        %1692 = vmatpush1.msra.mxu0 %v1429
        %1693 = vmatprep.subr.mxu0 %v1462
        %1694 = vmatpush1.msra.mxu0 %v1461
        %1695 = vmatprep.subr.mxu0 %v1494
        %1696 = vmatpush1.msra.mxu0 %v1493
        %1697 = vmatprep.subr.mxu0 %v1526
        %1698 = vmatpush1.msra.mxu0 %v1525
        %1699 = vmatprep.subr.mxu0 0.0
        %1700 = vmatpush1.msra.mxu0 0.0
        %1701 = vmatprep.subr.mxu0 0.0
        %1702 = vmatpush1.msra.mxu0 0.0
        %1703 = vmatprep.subr.mxu0 0.0
        %1704 = vmatpush1.msra.mxu0 0.0
        %1705 = vmatprep.subr.mxu0 0.0
        %1706 = vmatpush1.msra.mxu0 0.0
        %1707 = vmatprep.subr.mxu0 0.0
        %1708 = vmatpush1.msra.mxu0 0.0
        %1709 = vmatprep.subr.mxu0 0.0
        %1710 = vmatpush1.msra.mxu0 0.0
        %1711 = vmatprep.subr.mxu0 0.0
        %1712 = vmatpush1.msra.mxu0 0.0
        %1713 = vmatprep.subr.mxu0 0.0
        %1714 = vmatpush1.msra.mxu0 0.0
        %1715 = vmatprep.subr.mxu0 0.0
        %1716 = vmatpush1.msra.mxu0 0.0
        %1717 = vmatprep.subr.mxu0 0.0
        %1718 = vmatpush1.msra.mxu0 0.0
        %1719 = vmatprep.subr.mxu0 0.0
        %1720 = vmatpush1.msra.mxu0 0.0
        %1721 = vmatprep.subr.mxu0 0.0
        %1722 = vmatpush1.msra.mxu0 0.0
        %1723 = vmatprep.subr.mxu0 0.0
        %1724 = vmatpush1.msra.mxu0 0.0
        %1725 = vmatprep.subr.mxu0 0.0
        %1726 = vmatpush1.msra.mxu0 0.0
        %1727 = vmatprep.subr.mxu0 0.0
        %1728 = vmatpush1.msra.mxu0 0.0
        %1729 = vmatprep.subr.mxu0 0.0
        %1730 = vmatpush1.msra.mxu0 0.0
        %1731 = vmatprep.subr.mxu0 0.0
        %1732 = vmatpush1.msra.mxu0 0.0
        %1733 = vmatprep.subr.mxu0 0.0
        %1734 = vmatpush1.msra.mxu0 0.0
        %1735 = vmatprep.subr.mxu0 0.0
        %1736 = vmatpush1.msra.mxu0 0.0
        %1737 = vmatprep.subr.mxu0 0.0
        %1738 = vmatpush1.msra.mxu0 0.0
        %1739 = vmatprep.subr.mxu0 0.0
        %1740 = vmatpush1.msra.mxu0 0.0
        %1741 = vmatprep.subr.mxu0 0.0
        %1742 = vmatpush1.msra.mxu0 0.0
        %1743 = vmatprep.subr.mxu0 0.0
        %1744 = vmatpush1.msra.mxu0 0.0
        %1745 = vmatprep.mubr.f32.mxu0 0.0
        %1746 = vmatmul.mubr.f32.gmra.mrb[0].mxu0 %v1537
        %v1747 = vpop.f32.mrb[0].mxu0
        %v1748 = vadd.f32 %v1534, %v1747
        %v1749 = vpop.f32.mrb[0].mxu0
        %v1750 = vadd.f32 %v1534, %v1749
        %1751 = vdwg.mxu0
        %1752 = vmatprep.subr.mxu0 %v1304
        %1753 = vmatpush1.msra.mxu0 %v1303
        %1754 = vmatprep.subr.mxu0 %v1336
        %1755 = vmatpush1.msra.mxu0 %v1335
        %1756 = vmatprep.subr.mxu0 %v1368
        %1757 = vmatpush1.msra.mxu0 %v1367
        %1758 = vmatprep.subr.mxu0 %v1400
        %1759 = vmatpush1.msra.mxu0 %v1399
        %1760 = vmatprep.subr.mxu0 %v1272
        %1761 = vmatpush1.msra.mxu0 %v1271
        %1762 = vmatprep.subr.mxu0 %v1432
        %1763 = vmatpush1.msra.mxu0 %v1431
        %1764 = vmatprep.subr.mxu0 %v1464
        %1765 = vmatpush1.msra.mxu0 %v1463
        %1766 = vmatprep.subr.mxu0 %v1496
        %1767 = vmatpush1.msra.mxu0 %v1495
        %1768 = vmatprep.subr.mxu0 %v1528
        %1769 = vmatpush1.msra.mxu0 %v1527
        %1770 = vmatprep.subr.mxu0 0.0
        %1771 = vmatpush1.msra.mxu0 0.0
        %1772 = vmatprep.subr.mxu0 0.0
        %1773 = vmatpush1.msra.mxu0 0.0
        %1774 = vmatprep.subr.mxu0 0.0
        %1775 = vmatpush1.msra.mxu0 0.0
        %1776 = vmatprep.subr.mxu0 0.0
        %1777 = vmatpush1.msra.mxu0 0.0
        %1778 = vmatprep.subr.mxu0 0.0
        %1779 = vmatpush1.msra.mxu0 0.0
        %1780 = vmatprep.subr.mxu0 0.0
        %1781 = vmatpush1.msra.mxu0 0.0
        %1782 = vmatprep.subr.mxu0 0.0
        %1783 = vmatpush1.msra.mxu0 0.0
        %1784 = vmatprep.subr.mxu0 0.0
        %1785 = vmatpush1.msra.mxu0 0.0
        %1786 = vmatprep.subr.mxu0 0.0
        %1787 = vmatpush1.msra.mxu0 0.0
        %1788 = vmatprep.subr.mxu0 0.0
        %1789 = vmatpush1.msra.mxu0 0.0
        %1790 = vmatprep.subr.mxu0 0.0
        %1791 = vmatpush1.msra.mxu0 0.0
        %1792 = vmatprep.subr.mxu0 0.0
        %1793 = vmatpush1.msra.mxu0 0.0
        %1794 = vmatprep.subr.mxu0 0.0
        %1795 = vmatpush1.msra.mxu0 0.0
        %1796 = vmatprep.subr.mxu0 0.0
        %1797 = vmatpush1.msra.mxu0 0.0
        %1798 = vmatprep.subr.mxu0 0.0
        %1799 = vmatpush1.msra.mxu0 0.0
        %1800 = vmatprep.subr.mxu0 0.0
        %1801 = vmatpush1.msra.mxu0 0.0
        %1802 = vmatprep.subr.mxu0 0.0
        %1803 = vmatpush1.msra.mxu0 0.0
        %1804 = vmatprep.subr.mxu0 0.0
        %1805 = vmatpush1.msra.mxu0 0.0
        %1806 = vmatprep.subr.mxu0 0.0
        %1807 = vmatpush1.msra.mxu0 0.0
        %1808 = vmatprep.subr.mxu0 0.0
        %1809 = vmatpush1.msra.mxu0 0.0
        %1810 = vmatprep.subr.mxu0 0.0
        %1811 = vmatpush1.msra.mxu0 0.0
        %1812 = vmatprep.subr.mxu0 0.0
        %1813 = vmatpush1.msra.mxu0 0.0
        %1814 = vmatprep.subr.mxu0 0.0
        %1815 = vmatpush1.msra.mxu0 0.0
        %1816 = vmatprep.mubr.f32.mxu0 0.0
        %1817 = vmatmul.mubr.f32.gmra.mrb[0].mxu0 %v1537
        %v1818 = vpop.f32.mrb[0].mxu0
        %v1819 = vadd.f32 %v1534, %v1818
        %v1820 = vpop.f32.mrb[0].mxu0
        %v1821 = vadd.f32 %v1534, %v1820
        %1822 = vdwg.mxu0
        %v1823 = vmax.f32 %v1606, 0.0
        %v1824 = vmax.f32 %v1608, 0.0
        %v1825 = vmax.f32 %v1677, 0.0
        %v1826 = vmax.f32 %v1679, 0.0
        %v1827 = vmax.f32 %v1748, 0.0
        %v1828 = vmax.f32 %v1750, 0.0
        %v1829 = vmax.f32 %v1819, 0.0
        %v1830 = vmax.f32 %v1821, 0.0
        %1831 = vrot.lane.b32.xlu0 %v1823, 17
        %v1832 = vpop.permute.xlu0 %1831
        %1833 = vrot.lane.b32.xlu0 %v1824, 17
        %v1834 = vpop.permute.xlu0 %1833
        %1835 = vrot.lane.b32.xlu0 %v1825, 17
        %v1836 = vpop.permute.xlu0 %1835
        %1837 = vrot.lane.b32.xlu0 %v1826, 17
        %v1838 = vpop.permute.xlu0 %1837
        %1839 = vrot.lane.b32.xlu0 %v1827, 17
        %v1840 = vpop.permute.xlu0 %1839
        %1841 = vrot.lane.b32.xlu0 %v1828, 17
        %v1842 = vpop.permute.xlu0 %1841
        %1843 = vrot.lane.b32.xlu0 %v1829, 17
        %v1844 = vpop.permute.xlu0 %1843
        %1845 = vrot.lane.b32.xlu0 %v1830, 17
        %v1846 = vpop.permute.xlu0 %1845
        %v1847 = vsel %vm722, %v1844, %v1846
        %v1848 = vsel %vm722, %v1842, %v1844
        %v1849 = vsel %vm722, %v1840, %v1842
        %v1850 = vsel %vm722, %v1838, %v1840
        %v1851 = vsel %vm722, %v1836, %v1838
        %v1852 = vsel %vm722, %v1834, %v1836
        %v1853 = vsel %vm722, %v1832, %v1834
        %v1854 = vsel %vm722, %v1846, %v1832
        %v1855 = vmul.f32 %v1854, %v352
        %v1856 = vmul.f32 %v1853, %v356
        %v1857 = vmul.f32 %v1852, %v360
        %v1858 = vmul.f32 %v1851, %v364
        %v1859 = vmul.f32 %v1850, %v368
        %v1860 = vmul.f32 %v1849, %v372
        %v1861 = vmul.f32 %v1848, %v376
        %v1862 = vmul.f32 %v1847, %v380
        %1863 = vrot.lane.b32.xlu0 %v1823, 16
        %v1864 = vpop.permute.xlu0 %1863
        %1865 = vrot.lane.b32.xlu0 %v1824, 16
        %v1866 = vpop.permute.xlu0 %1865
        %1867 = vrot.lane.b32.xlu0 %v1825, 16
        %v1868 = vpop.permute.xlu0 %1867
        %1869 = vrot.lane.b32.xlu0 %v1826, 16
        %v1870 = vpop.permute.xlu0 %1869
        %1871 = vrot.lane.b32.xlu0 %v1827, 16
        %v1872 = vpop.permute.xlu0 %1871
        %1873 = vrot.lane.b32.xlu0 %v1828, 16
        %v1874 = vpop.permute.xlu0 %1873
        %1875 = vrot.lane.b32.xlu0 %v1829, 16
        %v1876 = vpop.permute.xlu0 %1875
        %1877 = vrot.lane.b32.xlu0 %v1830, 16
        %v1878 = vpop.permute.xlu0 %1877
        %v1879 = vsel %vm755, %v1876, %v1878
        %v1880 = vsel %vm755, %v1874, %v1876
        %v1881 = vsel %vm755, %v1872, %v1874
        %v1882 = vsel %vm755, %v1870, %v1872
        %v1883 = vsel %vm755, %v1868, %v1870
        %v1884 = vsel %vm755, %v1866, %v1868
        %v1885 = vsel %vm755, %v1864, %v1866
        %v1886 = vsel %vm755, %v1878, %v1864
        %v1887 = vmul.f32 %v1886, %v397
        %v1888 = vmul.f32 %v1885, %v401
        %v1889 = vmul.f32 %v1884, %v405
        %v1890 = vmul.f32 %v1883, %v409
        %v1891 = vmul.f32 %v1882, %v413
        %v1892 = vmul.f32 %v1881, %v417
        %v1893 = vmul.f32 %v1880, %v421
        %v1894 = vmul.f32 %v1879, %v425
        %1895 = vrot.lane.b32.xlu0 %v1823, 15
        %v1896 = vpop.permute.xlu0 %1895
        %1897 = vrot.lane.b32.xlu0 %v1824, 15
        %v1898 = vpop.permute.xlu0 %1897
        %1899 = vrot.lane.b32.xlu0 %v1825, 15
        %v1900 = vpop.permute.xlu0 %1899
        %1901 = vrot.lane.b32.xlu0 %v1826, 15
        %v1902 = vpop.permute.xlu0 %1901
        %1903 = vrot.lane.b32.xlu0 %v1827, 15
        %v1904 = vpop.permute.xlu0 %1903
        %1905 = vrot.lane.b32.xlu0 %v1828, 15
        %v1906 = vpop.permute.xlu0 %1905
        %1907 = vrot.lane.b32.xlu0 %v1829, 15
        %v1908 = vpop.permute.xlu0 %1907
        %1909 = vrot.lane.b32.xlu0 %v1830, 15
        %v1910 = vpop.permute.xlu0 %1909
        %v1911 = vsel %vm788, %v1908, %v1910
        %v1912 = vsel %vm788, %v1906, %v1908
        %v1913 = vsel %vm788, %v1904, %v1906
        %v1914 = vsel %vm788, %v1902, %v1904
        %v1915 = vsel %vm788, %v1900, %v1902
        %v1916 = vsel %vm788, %v1898, %v1900
        %v1917 = vsel %vm788, %v1896, %v1898
        %v1918 = vsel %vm788, %v1910, %v1896
        %v1919 = vmul.f32 %v1918, %v442
        %v1920 = vmul.f32 %v1917, %v446
        %v1921 = vmul.f32 %v1916, %v450
        %v1922 = vmul.f32 %v1915, %v454
        %v1923 = vmul.f32 %v1914, %v458
        %v1924 = vmul.f32 %v1913, %v462
        %v1925 = vmul.f32 %v1912, %v466
        %v1926 = vmul.f32 %v1911, %v470
        %1927 = vrot.lane.b32.xlu0 %v1823, 1
        %v1928 = vpop.permute.xlu0 %1927
        %1929 = vrot.lane.b32.xlu0 %v1824, 1
        %v1930 = vpop.permute.xlu0 %1929
        %1931 = vrot.lane.b32.xlu0 %v1825, 1
        %v1932 = vpop.permute.xlu0 %1931
        %1933 = vrot.lane.b32.xlu0 %v1826, 1
        %v1934 = vpop.permute.xlu0 %1933
        %1935 = vrot.lane.b32.xlu0 %v1827, 1
        %v1936 = vpop.permute.xlu0 %1935
        %1937 = vrot.lane.b32.xlu0 %v1828, 1
        %v1938 = vpop.permute.xlu0 %1937
        %1939 = vrot.lane.b32.xlu0 %v1829, 1
        %v1940 = vpop.permute.xlu0 %1939
        %1941 = vrot.lane.b32.xlu0 %v1830, 1
        %v1942 = vpop.permute.xlu0 %1941
        %v1943 = vsel %vm821, %v1940, %v1942
        %v1944 = vsel %vm821, %v1938, %v1940
        %v1945 = vsel %vm821, %v1936, %v1938
        %v1946 = vsel %vm821, %v1934, %v1936
        %v1947 = vsel %vm821, %v1932, %v1934
        %v1948 = vsel %vm821, %v1930, %v1932
        %v1949 = vsel %vm821, %v1928, %v1930
        %v1950 = vsel %vm821, %v1942, %v1928
        %v1951 = vmul.f32 %v1950, %v487
        %v1952 = vmul.f32 %v1949, %v491
        %v1953 = vmul.f32 %v1948, %v495
        %v1954 = vmul.f32 %v1947, %v499
        %v1955 = vmul.f32 %v1946, %v503
        %v1956 = vmul.f32 %v1945, %v507
        %v1957 = vmul.f32 %v1944, %v511
        %v1958 = vmul.f32 %v1943, %v515
        %1959 = vrot.lane.b32.xlu0 %v1823, 127
        %v1960 = vpop.permute.xlu0 %1959
        %1961 = vrot.lane.b32.xlu0 %v1824, 127
        %v1962 = vpop.permute.xlu0 %1961
        %1963 = vrot.lane.b32.xlu0 %v1825, 127
        %v1964 = vpop.permute.xlu0 %1963
        %1965 = vrot.lane.b32.xlu0 %v1826, 127
        %v1966 = vpop.permute.xlu0 %1965
        %1967 = vrot.lane.b32.xlu0 %v1827, 127
        %v1968 = vpop.permute.xlu0 %1967
        %1969 = vrot.lane.b32.xlu0 %v1828, 127
        %v1970 = vpop.permute.xlu0 %1969
        %1971 = vrot.lane.b32.xlu0 %v1829, 127
        %v1972 = vpop.permute.xlu0 %1971
        %1973 = vrot.lane.b32.xlu0 %v1830, 127
        %v1974 = vpop.permute.xlu0 %1973
        %v1975 = vsel %vm854, %v1972, %v1974
        %v1976 = vsel %vm854, %v1970, %v1972
        %v1977 = vsel %vm854, %v1968, %v1970
        %v1978 = vsel %vm854, %v1966, %v1968
        %v1979 = vsel %vm854, %v1964, %v1966
        %v1980 = vsel %vm854, %v1962, %v1964
        %v1981 = vsel %vm854, %v1960, %v1962
        %v1982 = vsel %vm854, %v1974, %v1960
        %v1983 = vmul.f32 %v1981, %v532
        %v1984 = vmul.f32 %v1980, %v536
        %v1985 = vmul.f32 %v1979, %v540
        %v1986 = vmul.f32 %v1978, %v544
        %v1987 = vmul.f32 %v1977, %v548
        %v1988 = vmul.f32 %v1976, %v552
        %v1989 = vmul.f32 %v1975, %v556
        %v1990 = vmul.f32 %v1982, %v560
        %1991 = vrot.lane.b32.xlu0 %v1823, 113
        %v1992 = vpop.permute.xlu0 %1991
        %1993 = vrot.lane.b32.xlu0 %v1824, 113
        %v1994 = vpop.permute.xlu0 %1993
        %1995 = vrot.lane.b32.xlu0 %v1825, 113
        %v1996 = vpop.permute.xlu0 %1995
        %1997 = vrot.lane.b32.xlu0 %v1826, 113
        %v1998 = vpop.permute.xlu0 %1997
        %1999 = vrot.lane.b32.xlu0 %v1827, 113
        %v2000 = vpop.permute.xlu0 %1999
        %2001 = vrot.lane.b32.xlu0 %v1828, 113
        %v2002 = vpop.permute.xlu0 %2001
        %2003 = vrot.lane.b32.xlu0 %v1829, 113
        %v2004 = vpop.permute.xlu0 %2003
        %2005 = vrot.lane.b32.xlu0 %v1830, 113
        %v2006 = vpop.permute.xlu0 %2005
        %v2007 = vsel %vm887, %v2004, %v2006
        %v2008 = vsel %vm887, %v2002, %v2004
        %v2009 = vsel %vm887, %v2000, %v2002
        %v2010 = vsel %vm887, %v1998, %v2000
        %v2011 = vsel %vm887, %v1996, %v1998
        %v2012 = vsel %vm887, %v1994, %v1996
        %v2013 = vsel %vm887, %v1992, %v1994
        %v2014 = vsel %vm887, %v2006, %v1992
        %v2015 = vmul.f32 %v2013, %v577
        %v2016 = vmul.f32 %v2012, %v581
        %v2017 = vmul.f32 %v2011, %v585
        %v2018 = vmul.f32 %v2010, %v589
        %v2019 = vmul.f32 %v2009, %v593
        %v2020 = vmul.f32 %v2008, %v597
        %v2021 = vmul.f32 %v2007, %v601
        %v2022 = vmul.f32 %v2014, %v605
        %2023 = vrot.lane.b32.xlu0 %v1823, 112
        %v2024 = vpop.permute.xlu0 %2023
        %2025 = vrot.lane.b32.xlu0 %v1824, 112
        %v2026 = vpop.permute.xlu0 %2025
        %2027 = vrot.lane.b32.xlu0 %v1825, 112
        %v2028 = vpop.permute.xlu0 %2027
        %2029 = vrot.lane.b32.xlu0 %v1826, 112
        %v2030 = vpop.permute.xlu0 %2029
        %2031 = vrot.lane.b32.xlu0 %v1827, 112
        %v2032 = vpop.permute.xlu0 %2031
        %2033 = vrot.lane.b32.xlu0 %v1828, 112
        %v2034 = vpop.permute.xlu0 %2033
        %2035 = vrot.lane.b32.xlu0 %v1829, 112
        %v2036 = vpop.permute.xlu0 %2035
        %2037 = vrot.lane.b32.xlu0 %v1830, 112
        %v2038 = vpop.permute.xlu0 %2037
        %v2039 = vsel %vm920, %v2036, %v2038
        %v2040 = vsel %vm920, %v2034, %v2036
        %v2041 = vsel %vm920, %v2032, %v2034
        %v2042 = vsel %vm920, %v2030, %v2032
        %v2043 = vsel %vm920, %v2028, %v2030
        %v2044 = vsel %vm920, %v2026, %v2028
        %v2045 = vsel %vm920, %v2024, %v2026
        %v2046 = vsel %vm920, %v2038, %v2024
        %v2047 = vmul.f32 %v2045, %v622
        %v2048 = vmul.f32 %v2044, %v626
        %v2049 = vmul.f32 %v2043, %v630
        %v2050 = vmul.f32 %v2042, %v634
        %v2051 = vmul.f32 %v2041, %v638
        %v2052 = vmul.f32 %v2040, %v642
        %v2053 = vmul.f32 %v2039, %v646
        %v2054 = vmul.f32 %v2046, %v650
        %2055 = vrot.lane.b32.xlu0 %v1823, 111
        %v2056 = vpop.permute.xlu0 %2055
        %2057 = vrot.lane.b32.xlu0 %v1824, 111
        %v2058 = vpop.permute.xlu0 %2057
        %2059 = vrot.lane.b32.xlu0 %v1825, 111
        %v2060 = vpop.permute.xlu0 %2059
        %2061 = vrot.lane.b32.xlu0 %v1826, 111
        %v2062 = vpop.permute.xlu0 %2061
        %2063 = vrot.lane.b32.xlu0 %v1827, 111
        %v2064 = vpop.permute.xlu0 %2063
        %2065 = vrot.lane.b32.xlu0 %v1828, 111
        %v2066 = vpop.permute.xlu0 %2065
        %2067 = vrot.lane.b32.xlu0 %v1829, 111
        %v2068 = vpop.permute.xlu0 %2067
        %2069 = vrot.lane.b32.xlu0 %v1830, 111
        %v2070 = vpop.permute.xlu0 %2069
        %v2071 = vsel %vm953, %v2068, %v2070
        %v2072 = vsel %vm953, %v2066, %v2068
        %v2073 = vsel %vm953, %v2064, %v2066
        %v2074 = vsel %vm953, %v2062, %v2064
        %v2075 = vsel %vm953, %v2060, %v2062
        %v2076 = vsel %vm953, %v2058, %v2060
        %v2077 = vsel %vm953, %v2056, %v2058
        %v2078 = vsel %vm953, %v2070, %v2056
        %v2079 = vmul.f32 %v2077, %v667
        %v2080 = vmul.f32 %v2076, %v671
        %v2081 = vmul.f32 %v2075, %v675
        %v2082 = vmul.f32 %v2074, %v679
        %v2083 = vmul.f32 %v2073, %v683
        %v2084 = vmul.f32 %v2072, %v687
        %v2085 = vmul.f32 %v2071, %v691
        %v2086 = vmul.f32 %v2078, %v695
        %v2087 = vld [vmem:[%s6] sm:$0xff]
        %v2088 = vld [vmem:[%s7] sm:$0xff]
        %2090 = vset.pattern.permute.xlu0 0
        %2091 = vperm.xlu0 %2090, %v2088
        %v2092 = vpop.permute.xlu0 %2091
        %vm2094 = vcmask 654336
        %v2096 = vsel %vm2094, %v2087, 0
        %2098 = vmatprep.subr.mxu0 %v1856
        %2099 = vmatpush1.msra.mxu0 %v1855
        %2100 = vmatprep.subr.mxu0 %v1888
        %2101 = vmatpush1.msra.mxu0 %v1887
        %2102 = vmatprep.subr.mxu0 %v1920
        %2103 = vmatpush1.msra.mxu0 %v1919
        %2104 = vmatprep.subr.mxu0 %v1952
        %2105 = vmatpush1.msra.mxu0 %v1951
        %2106 = vmatprep.subr.mxu0 %v1824
        %2107 = vmatpush1.msra.mxu0 %v1823
        %2108 = vmatprep.subr.mxu0 %v1984
        %2109 = vmatpush1.msra.mxu0 %v1983
        %2110 = vmatprep.subr.mxu0 %v2016
        %2111 = vmatpush1.msra.mxu0 %v2015
        %2112 = vmatprep.subr.mxu0 %v2048
        %2113 = vmatpush1.msra.mxu0 %v2047
        %2114 = vmatprep.subr.mxu0 %v2080
        %2115 = vmatpush1.msra.mxu0 %v2079
        %2116 = vmatprep.subr.mxu0 %v338
        %2117 = vmatpush1.msra.mxu0 %v337
        %2118 = vmatprep.subr.mxu0 0.0
        %2119 = vmatpush1.msra.mxu0 0.0
        %2120 = vmatprep.subr.mxu0 0.0
        %2121 = vmatpush1.msra.mxu0 0.0
        %2122 = vmatprep.subr.mxu0 0.0
        %2123 = vmatpush1.msra.mxu0 0.0
        %2124 = vmatprep.subr.mxu0 0.0
        %2125 = vmatpush1.msra.mxu0 0.0
        %2126 = vmatprep.subr.mxu0 0.0
        %2127 = vmatpush1.msra.mxu0 0.0
        %2128 = vmatprep.subr.mxu0 0.0
        %2129 = vmatpush1.msra.mxu0 0.0
        %2130 = vmatprep.subr.mxu0 0.0
        %2131 = vmatpush1.msra.mxu0 0.0
        %2132 = vmatprep.subr.mxu0 0.0
        %2133 = vmatpush1.msra.mxu0 0.0
        %2134 = vmatprep.subr.mxu0 0.0
        %2135 = vmatpush1.msra.mxu0 0.0
        %2136 = vmatprep.subr.mxu0 0.0
        %2137 = vmatpush1.msra.mxu0 0.0
        %2138 = vmatprep.subr.mxu0 0.0
        %2139 = vmatpush1.msra.mxu0 0.0
        %2140 = vmatprep.subr.mxu0 0.0
        %2141 = vmatpush1.msra.mxu0 0.0
        %2142 = vmatprep.subr.mxu0 0.0
        %2143 = vmatpush1.msra.mxu0 0.0
        %2144 = vmatprep.subr.mxu0 0.0
        %2145 = vmatpush1.msra.mxu0 0.0
        %2146 = vmatprep.subr.mxu0 0.0
        %2147 = vmatpush1.msra.mxu0 0.0
        %2148 = vmatprep.subr.mxu0 0.0
        %2149 = vmatpush1.msra.mxu0 0.0
        %2150 = vmatprep.subr.mxu0 0.0
        %2151 = vmatpush1.msra.mxu0 0.0
        %2152 = vmatprep.subr.mxu0 0.0
        %2153 = vmatpush1.msra.mxu0 0.0
        %2154 = vmatprep.subr.mxu0 0.0
        %2155 = vmatpush1.msra.mxu0 0.0
        %2156 = vmatprep.subr.mxu0 0.0
        %2157 = vmatpush1.msra.mxu0 0.0
        %2158 = vmatprep.subr.mxu0 0.0
        %2159 = vmatpush1.msra.mxu0 0.0
        %2160 = vmatprep.subr.mxu0 0.0
        %2161 = vmatpush1.msra.mxu0 0.0
        %2162 = vmatprep.mubr.f32.mxu0 0.0
        %2163 = vmatmul.mubr.f32.gmra.mrb[0].mxu0 %v2096
        %v2164 = vpop.f32.mrb[0].mxu0
        %v2165 = vadd.f32 %v2092, %v2164
        %v2166 = vpop.f32.mrb[0].mxu0
        %v2167 = vadd.f32 %v2092, %v2166
        %2168 = vdwg.mxu0
        %2169 = vmatprep.subr.mxu0 %v1858
        %2170 = vmatpush1.msra.mxu0 %v1857
        %2171 = vmatprep.subr.mxu0 %v1890
        %2172 = vmatpush1.msra.mxu0 %v1889
        %2173 = vmatprep.subr.mxu0 %v1922
        %2174 = vmatpush1.msra.mxu0 %v1921
        %2175 = vmatprep.subr.mxu0 %v1954
        %2176 = vmatpush1.msra.mxu0 %v1953
        %2177 = vmatprep.subr.mxu0 %v1826
        %2178 = vmatpush1.msra.mxu0 %v1825
        %2179 = vmatprep.subr.mxu0 %v1986
        %2180 = vmatpush1.msra.mxu0 %v1985
        %2181 = vmatprep.subr.mxu0 %v2018
        %2182 = vmatpush1.msra.mxu0 %v2017
        %2183 = vmatprep.subr.mxu0 %v2050
        %2184 = vmatpush1.msra.mxu0 %v2049
        %2185 = vmatprep.subr.mxu0 %v2082
        %2186 = vmatpush1.msra.mxu0 %v2081
        %2187 = vmatprep.subr.mxu0 %v340
        %2188 = vmatpush1.msra.mxu0 %v339
        %2189 = vmatprep.subr.mxu0 0.0
        %2190 = vmatpush1.msra.mxu0 0.0
        %2191 = vmatprep.subr.mxu0 0.0
        %2192 = vmatpush1.msra.mxu0 0.0
        %2193 = vmatprep.subr.mxu0 0.0
        %2194 = vmatpush1.msra.mxu0 0.0
        %2195 = vmatprep.subr.mxu0 0.0
        %2196 = vmatpush1.msra.mxu0 0.0
        %2197 = vmatprep.subr.mxu0 0.0
        %2198 = vmatpush1.msra.mxu0 0.0
        %2199 = vmatprep.subr.mxu0 0.0
        %2200 = vmatpush1.msra.mxu0 0.0
        %2201 = vmatprep.subr.mxu0 0.0
        %2202 = vmatpush1.msra.mxu0 0.0
        %2203 = vmatprep.subr.mxu0 0.0
        %2204 = vmatpush1.msra.mxu0 0.0
        %2205 = vmatprep.subr.mxu0 0.0
        %2206 = vmatpush1.msra.mxu0 0.0
        %2207 = vmatprep.subr.mxu0 0.0
        %2208 = vmatpush1.msra.mxu0 0.0
        %2209 = vmatprep.subr.mxu0 0.0
        %2210 = vmatpush1.msra.mxu0 0.0
        %2211 = vmatprep.subr.mxu0 0.0
        %2212 = vmatpush1.msra.mxu0 0.0
        %2213 = vmatprep.subr.mxu0 0.0
        %2214 = vmatpush1.msra.mxu0 0.0
        %2215 = vmatprep.subr.mxu0 0.0
        %2216 = vmatpush1.msra.mxu0 0.0
        %2217 = vmatprep.subr.mxu0 0.0
        %2218 = vmatpush1.msra.mxu0 0.0
        %2219 = vmatprep.subr.mxu0 0.0
        %2220 = vmatpush1.msra.mxu0 0.0
        %2221 = vmatprep.subr.mxu0 0.0
        %2222 = vmatpush1.msra.mxu0 0.0
        %2223 = vmatprep.subr.mxu0 0.0
        %2224 = vmatpush1.msra.mxu0 0.0
        %2225 = vmatprep.subr.mxu0 0.0
        %2226 = vmatpush1.msra.mxu0 0.0
        %2227 = vmatprep.subr.mxu0 0.0
        %2228 = vmatpush1.msra.mxu0 0.0
        %2229 = vmatprep.subr.mxu0 0.0
        %2230 = vmatpush1.msra.mxu0 0.0
        %2231 = vmatprep.subr.mxu0 0.0
        %2232 = vmatpush1.msra.mxu0 0.0
        %2233 = vmatprep.mubr.f32.mxu0 0.0
        %2234 = vmatmul.mubr.f32.gmra.mrb[0].mxu0 %v2096
        %v2235 = vpop.f32.mrb[0].mxu0
        %v2236 = vadd.f32 %v2092, %v2235
        %v2237 = vpop.f32.mrb[0].mxu0
        %v2238 = vadd.f32 %v2092, %v2237
        %2239 = vdwg.mxu0
        %2240 = vmatprep.subr.mxu0 %v1860
        %2241 = vmatpush1.msra.mxu0 %v1859
        %2242 = vmatprep.subr.mxu0 %v1892
        %2243 = vmatpush1.msra.mxu0 %v1891
        %2244 = vmatprep.subr.mxu0 %v1924
        %2245 = vmatpush1.msra.mxu0 %v1923
        %2246 = vmatprep.subr.mxu0 %v1956
        %2247 = vmatpush1.msra.mxu0 %v1955
        %2248 = vmatprep.subr.mxu0 %v1828
        %2249 = vmatpush1.msra.mxu0 %v1827
        %2250 = vmatprep.subr.mxu0 %v1988
        %2251 = vmatpush1.msra.mxu0 %v1987
        %2252 = vmatprep.subr.mxu0 %v2020
        %2253 = vmatpush1.msra.mxu0 %v2019
        %2254 = vmatprep.subr.mxu0 %v2052
        %2255 = vmatpush1.msra.mxu0 %v2051
        %2256 = vmatprep.subr.mxu0 %v2084
        %2257 = vmatpush1.msra.mxu0 %v2083
        %2258 = vmatprep.subr.mxu0 %v342
        %2259 = vmatpush1.msra.mxu0 %v341
        %2260 = vmatprep.subr.mxu0 0.0
        %2261 = vmatpush1.msra.mxu0 0.0
        %2262 = vmatprep.subr.mxu0 0.0
        %2263 = vmatpush1.msra.mxu0 0.0
        %2264 = vmatprep.subr.mxu0 0.0
        %2265 = vmatpush1.msra.mxu0 0.0
        %2266 = vmatprep.subr.mxu0 0.0
        %2267 = vmatpush1.msra.mxu0 0.0
        %2268 = vmatprep.subr.mxu0 0.0
        %2269 = vmatpush1.msra.mxu0 0.0
        %2270 = vmatprep.subr.mxu0 0.0
        %2271 = vmatpush1.msra.mxu0 0.0
        %2272 = vmatprep.subr.mxu0 0.0
        %2273 = vmatpush1.msra.mxu0 0.0
        %2274 = vmatprep.subr.mxu0 0.0
        %2275 = vmatpush1.msra.mxu0 0.0
        %2276 = vmatprep.subr.mxu0 0.0
        %2277 = vmatpush1.msra.mxu0 0.0
        %2278 = vmatprep.subr.mxu0 0.0
        %2279 = vmatpush1.msra.mxu0 0.0
        %2280 = vmatprep.subr.mxu0 0.0
        %2281 = vmatpush1.msra.mxu0 0.0
        %2282 = vmatprep.subr.mxu0 0.0
        %2283 = vmatpush1.msra.mxu0 0.0
        %2284 = vmatprep.subr.mxu0 0.0
        %2285 = vmatpush1.msra.mxu0 0.0
        %2286 = vmatprep.subr.mxu0 0.0
        %2287 = vmatpush1.msra.mxu0 0.0
        %2288 = vmatprep.subr.mxu0 0.0
        %2289 = vmatpush1.msra.mxu0 0.0
        %2290 = vmatprep.subr.mxu0 0.0
        %2291 = vmatpush1.msra.mxu0 0.0
        %2292 = vmatprep.subr.mxu0 0.0
        %2293 = vmatpush1.msra.mxu0 0.0
        %2294 = vmatprep.subr.mxu0 0.0
        %2295 = vmatpush1.msra.mxu0 0.0
        %2296 = vmatprep.subr.mxu0 0.0
        %2297 = vmatpush1.msra.mxu0 0.0
        %2298 = vmatprep.subr.mxu0 0.0
        %2299 = vmatpush1.msra.mxu0 0.0
        %2300 = vmatprep.subr.mxu0 0.0
        %2301 = vmatpush1.msra.mxu0 0.0
        %2302 = vmatprep.subr.mxu0 0.0
        %2303 = vmatpush1.msra.mxu0 0.0
        %2304 = vmatprep.mubr.f32.mxu0 0.0
        %2305 = vmatmul.mubr.f32.gmra.mrb[0].mxu0 %v2096
        %v2306 = vpop.f32.mrb[0].mxu0
        %v2307 = vadd.f32 %v2092, %v2306
        %v2308 = vpop.f32.mrb[0].mxu0
        %v2309 = vadd.f32 %v2092, %v2308
        %2310 = vdwg.mxu0
        %2311 = vmatprep.subr.mxu0 %v1862
        %2312 = vmatpush1.msra.mxu0 %v1861
        %2313 = vmatprep.subr.mxu0 %v1894
        %2314 = vmatpush1.msra.mxu0 %v1893
        %2315 = vmatprep.subr.mxu0 %v1926
        %2316 = vmatpush1.msra.mxu0 %v1925
        %2317 = vmatprep.subr.mxu0 %v1958
        %2318 = vmatpush1.msra.mxu0 %v1957
        %2319 = vmatprep.subr.mxu0 %v1830
        %2320 = vmatpush1.msra.mxu0 %v1829
        %2321 = vmatprep.subr.mxu0 %v1990
        %2322 = vmatpush1.msra.mxu0 %v1989
        %2323 = vmatprep.subr.mxu0 %v2022
        %2324 = vmatpush1.msra.mxu0 %v2021
        %2325 = vmatprep.subr.mxu0 %v2054
        %2326 = vmatpush1.msra.mxu0 %v2053
        %2327 = vmatprep.subr.mxu0 %v2086
        %2328 = vmatpush1.msra.mxu0 %v2085
        %2329 = vmatprep.subr.mxu0 %v344
        %2330 = vmatpush1.msra.mxu0 %v343
        %2331 = vmatprep.subr.mxu0 0.0
        %2332 = vmatpush1.msra.mxu0 0.0
        %2333 = vmatprep.subr.mxu0 0.0
        %2334 = vmatpush1.msra.mxu0 0.0
        %2335 = vmatprep.subr.mxu0 0.0
        %2336 = vmatpush1.msra.mxu0 0.0
        %2337 = vmatprep.subr.mxu0 0.0
        %2338 = vmatpush1.msra.mxu0 0.0
        %2339 = vmatprep.subr.mxu0 0.0
        %2340 = vmatpush1.msra.mxu0 0.0
        %2341 = vmatprep.subr.mxu0 0.0
        %2342 = vmatpush1.msra.mxu0 0.0
        %2343 = vmatprep.subr.mxu0 0.0
        %2344 = vmatpush1.msra.mxu0 0.0
        %2345 = vmatprep.subr.mxu0 0.0
        %2346 = vmatpush1.msra.mxu0 0.0
        %2347 = vmatprep.subr.mxu0 0.0
        %2348 = vmatpush1.msra.mxu0 0.0
        %2349 = vmatprep.subr.mxu0 0.0
        %2350 = vmatpush1.msra.mxu0 0.0
        %2351 = vmatprep.subr.mxu0 0.0
        %2352 = vmatpush1.msra.mxu0 0.0
        %2353 = vmatprep.subr.mxu0 0.0
        %2354 = vmatpush1.msra.mxu0 0.0
        %2355 = vmatprep.subr.mxu0 0.0
        %2356 = vmatpush1.msra.mxu0 0.0
        %2357 = vmatprep.subr.mxu0 0.0
        %2358 = vmatpush1.msra.mxu0 0.0
        %2359 = vmatprep.subr.mxu0 0.0
        %2360 = vmatpush1.msra.mxu0 0.0
        %2361 = vmatprep.subr.mxu0 0.0
        %2362 = vmatpush1.msra.mxu0 0.0
        %2363 = vmatprep.subr.mxu0 0.0
        %2364 = vmatpush1.msra.mxu0 0.0
        %2365 = vmatprep.subr.mxu0 0.0
        %2366 = vmatpush1.msra.mxu0 0.0
        %2367 = vmatprep.subr.mxu0 0.0
        %2368 = vmatpush1.msra.mxu0 0.0
        %2369 = vmatprep.subr.mxu0 0.0
        %2370 = vmatpush1.msra.mxu0 0.0
        %2371 = vmatprep.subr.mxu0 0.0
        %2372 = vmatpush1.msra.mxu0 0.0
        %2373 = vmatprep.subr.mxu0 0.0
        %2374 = vmatpush1.msra.mxu0 0.0
        %2375 = vmatprep.mubr.f32.mxu0 0.0
        %2376 = vmatmul.mubr.f32.gmra.mrb[0].mxu0 %v2096
        %v2377 = vpop.f32.mrb[0].mxu0
        %v2378 = vadd.f32 %v2092, %v2377
        %v2379 = vpop.f32.mrb[0].mxu0
        %v2380 = vadd.f32 %v2092, %v2379
        %2381 = vdwg.mxu0
        %v2382 = vmax.f32 %v2165, 0.0
        %v2383 = vmax.f32 %v2167, 0.0
        %v2384 = vmax.f32 %v2236, 0.0
        %v2385 = vmax.f32 %v2238, 0.0
        %v2386 = vmax.f32 %v2307, 0.0
        %v2387 = vmax.f32 %v2309, 0.0
        %v2388 = vmax.f32 %v2378, 0.0
        %v2389 = vmax.f32 %v2380, 0.0
        %2390 = vst [vmem:[%s336] sm:$0xff] %v2382
        %2391 = vst [vmem:[%s336 + $0x8] sm:$0xff] %v2383
        %2392 = vst [vmem:[%s336 + $0x10] sm:$0xff] %v2384
        %2393 = vst [vmem:[%s336 + $0x18] sm:$0xff] %v2385
        %2394 = vst [vmem:[%s336 + $0x20] sm:$0xff] %v2386
        %2395 = vst [vmem:[%s336 + $0x28] sm:$0xff] %v2387
        %2396 = vst [vmem:[%s336 + $0x30] sm:$0xff] %v2388
        %2397 = vst [vmem:[%s336 + $0x38] sm:$0xff] %v2389
        %s2398 = sand.u32 %s207, 1
        %s2399 = scalar_lea.sflag [#allocation4], %s2398
        %s2400 = sand.u32 %s207, 1
        %s2401 = smul.addr %s2400, 64
        %s2402 = scalar_lea.vmem [#allocation7], %s2401
        // Predicated region
        $region61: #{tpu_custom_call.1} parent=51 // pred_check
          %p2403 = pneg %p217
        $region62: #{tpu_custom_call.1} parent=51 // pred_check_branch
          %2405 = sbr.rel (%p2403) target = $region64
        $region63: #{tpu_custom_call.1} parent=51 // pred_region
          %s2407 = ssub.s32 1024, 1024
          %2408 = vsyncadd %s2399, %s2407
          %s2409 = smul.addr %s26, 8
          %s2410 = smul.addr %s2409, 128
          %s2411 = scalar_lea.hbm %s8, %s2410
          %s2413 = sshll.u32 %s2402, 4
          %s2414 = int_to_ptr.vmem [resolvable:$true] %s2413
          %2416 = dma.vmem_to_hbm [thread:$0]  %s2414, 1024, %s2411, %s2399
        $region64: #{tpu_custom_call.1} parent=51 // pred_fallthru
          _
      $region52: #{tpu_custom_call.1} parent=5 // pred_fallthru
        _
      %p2417 = scmp.le.s32.totalorder 2, %s21
      // Predicated region
      $region65: #{tpu_custom_call.1} parent=5 // pred_check
        %p2418 = pneg %p2417
      $region66: #{tpu_custom_call.1} parent=5 // pred_check_branch
        %2420 = sbr.rel (%p2418) target = $region68
      $region67: #{tpu_custom_call.1} parent=5 // pred_region
        %s2421 = ssub.s32 %s21, 2
        // Predicated region
        $region69: #{tpu_custom_call.1} parent=67 // pred_check
          %p2422 = pneg %p223
        $region70: #{tpu_custom_call.1} parent=67 // pred_check_branch
          %2424 = sbr.rel (%p2422) target = $region72
        $region71: #{tpu_custom_call.1} parent=67 // pred_region
          %s2425 = sand.u32 %s208, 1
          %s2426 = scalar_lea.sflag [#allocation4], %s2425
          %s2427 = sand.u32 %s208, 1
          %s2428 = smul.addr %s2427, 64
          %s2429 = scalar_lea.vmem [#allocation7], %s2428
          %2430 = dma.done %s2426, 1024
        $region72: #{tpu_custom_call.1} parent=67 // pred_fallthru
          _
      $region68: #{tpu_custom_call.1} parent=5 // pred_fallthru
        _
    $region6: #{tpu_custom_call.1} parent=1 // loop_footer
      %s25 = sadd.s32 1, %s21
    $region7: #{tpu_custom_call.1} parent=1 // loop_footer_branch
      %20 = sbr.rel target = $region3
    $region8: #{tpu_custom_call.1} parent=1 // loop_exit
      _
    %2431 = vsyncpa [#allocation3], 1
    %s2432 = scalar_lea.sflag [#allocation3], 1
    %2433 = vsyncpa %s2432, 1
    %2434 = vsyncpa [#allocation6], 1
    %2435 = vsyncpa [#allocation4], 1
    %s2436 = scalar_lea.sflag [#allocation4], 1
    %2437 = vsyncpa %s2436, 1

</llo_original>
